<compile_context>
chip_gen: v7x
topology: tpu7x:2x2x1
jax: 0.10.0
libtpu: 0.0.40
codegen_flags: <defaults>
</compile_context>

<pallas_src>
import functools
import math

import numpy as np
import jax
import jax.numpy as jnp
from jax.experimental import pallas as pl
from jax.experimental.pallas import tpu as pltpu


# ----------------------------------------------------------------------------
# constant-matrix builders (data independent, parameter-like)
# ----------------------------------------------------------------------------
def _interp_matrix(out_size, in_size):
    """PyTorch F.interpolate(mode='bilinear', align_corners=False) as (out,in)."""
    A = np.zeros((out_size, in_size), np.float32)
    scale = in_size / out_size
    for i in range(out_size):
        src = max((i + 0.5) * scale - 0.5, 0.0)
        i0 = min(int(np.floor(src)), in_size - 1)
        i1 = min(i0 + 1, in_size - 1)
        lam = src - i0
        A[i, i0] += 1.0 - lam
        A[i, i1] += lam
    return A


# ----------------------------------------------------------------------------
# Pallas kernel: one batch element per grid step
# ----------------------------------------------------------------------------
def _align_kernel(low_ref, hfe_ref, wl_ref, wh_ref, mupT_ref,
                  wcat_f_ref, wcat_r_ref, masks_f_ref, masks_r_ref, base_ref,
                  out_ref, *, H, W):
    HW = H * W
    low = low_ref[0]                      # (Cl, HW)
    hfe = hfe_ref[0]                      # (Ch, H2*W2)

    # ---- 1x1 convs: weight @ activation (lane axis = HW, dense) -------------
    low_p = jnp.dot(wl_ref[...], low, preferred_element_type=jnp.float32)    # (P, HW)
    h_p = jnp.dot(wh_ref[...], hfe, preferred_element_type=jnp.float32)      # (P, H2W2)

    # ---- bilinear upsample (align_corners=False) as one matmul --------------
    h_up = jnp.dot(h_p, mupT_ref[...], preferred_element_type=jnp.float32)   # (P, HW)

    # ---- roll-convention probe ----------------------------------------------
    # The 3x3-conv taps below use lane rotations.  A one-vreg probe detects the
    # rotate direction at runtime and picks the matching (tap-ordered vs
    # tap-reversed) weights/masks, so the kernel is correct under either
    # rotate convention.
    probe = jax.lax.broadcasted_iota(jnp.int32, (8, 128), 1)
    is_fwd = pltpu.roll(probe, 1, 1)[0:1, 0:1] == 127                        # (1, 1) bool
    masks = jnp.where(is_fwd, masks_f_ref[...], masks_r_ref[...])            # (9, HW)
    wcat = jnp.where(is_fwd, wcat_f_ref[...], wcat_r_ref[...])               # (2, 9*2P)

    # ---- 3x3 conv (padding=1) -> 2-channel flow ------------------------------
    # tap (ky,kx): shifted[:, p] = cat[:, p + d] (zero padded), d = (ky-1)*W+(kx-1)
    cat = jnp.concatenate([h_up, low_p], axis=0)                             # (2P, HW)
    taps = []
    for ky in range(3):
        for kx in range(3):
            k = ky * 3 + kx
            d = (ky - 1) * W + (kx - 1)
            shifted = cat if d == 0 else pltpu.roll(cat, (-d) % HW, 1)
            taps.append(shifted * masks[k:k + 1, :])
    stacked = jnp.concatenate(taps, axis=0)                                  # (9*2P, HW)
    flow = jnp.dot(wcat, stacked, preferred_element_type=jnp.float32)        # (2, HW)

    # ---- flow_warp == grid_sample(bilinear, zeros, align_corners=False) -----
    base = base_ref[...]                                                     # (2, HW)
    gx = base[0:1, :] + flow[0:1, :] * (1.0 / W)
    gy = base[1:2, :] + flow[1:2, :] * (1.0 / H)
    xs = (gx + 1.0) * (0.5 * W) - 0.5
    ys = (gy + 1.0) * (0.5 * H) - 0.5
    x0f = jnp.floor(xs)
    y0f = jnp.floor(ys)
    wx1 = xs - x0f
    wx0 = 1.0 - wx1
    wy1 = ys - y0f
    wy0 = 1.0 - wy1
    x0 = x0f.astype(jnp.int32)
    y0 = y0f.astype(jnp.int32)
    x1 = x0 + 1
    y1 = y0 + 1

    # one-hot sampling matrix S: source index q on sublanes, output p on lanes,
    # accumulated in place over the 4 bilinear corners.
    q = jax.lax.broadcasted_iota(jnp.int32, (HW, HW), 0)

    def corner(yc, xc, wgt):
        # `valid` must stay fused with the index match: an OOB xc/yc would
        # otherwise alias a valid flat index of a neighbouring row.
        valid = (xc >= 0) & (xc < W) & (yc >= 0) & (yc < H)                  # (1, HW)
        hit = (q == yc * W + xc) & valid                                     # (HW, HW)
        return jnp.where(hit, wgt, 0.0)

    S = corner(y0, x0, wy0 * wx0)
    S = S + corner(y0, x1, wy0 * wx1)
    S = S + corner(y1, x0, wy1 * wx0)
    S = S + corner(y1, x1, wy1 * wx1)
    # TODO(synk): for realistic HW, tile this S build + matmul over lane blocks
    # of p so the live set is (HW, tile) and fits v7x's 64 MiB VMEM.

    out_ref[0] = jnp.dot(h_up, S, preferred_element_type=jnp.float32).astype(out_ref.dtype)


# ----------------------------------------------------------------------------
# wrapper
# ----------------------------------------------------------------------------
def align_module_segmap(low_nchw, h_nchw, w_down_l, w_down_h, w_flow):
    N, Cl, H, W = low_nchw.shape
    _, Ch, H2, W2 = h_nchw.shape
    P = w_down_l.shape[0]
    HW, H2W2 = H * W, H2 * W2

    # ---- small data-independent constants -----------------------------------
    wl = w_down_l[:, :, 0, 0]                         # (P, Cl)
    wh = w_down_h[:, :, 0, 0]                         # (P, Ch)

    A_h = _interp_matrix(H, H2)
    A_w = _interp_matrix(W, W2)
    mupT = jnp.asarray(np.kron(A_h, A_w).T)           # (H2W2, HW)

    # border-validity masks for the 9 conv taps (flattened-spatial, lane axis)
    masks_np = np.zeros((9, HW), np.float32)
    for ky in range(3):
        for kx in range(3):
            dy, dx = ky - 1, kx - 1
            m = np.zeros((H, W), np.float32)
            m[max(0, -dy):H - max(0, dy), max(0, -dx):W - max(0, dx)] = 1.0
            masks_np[ky * 3 + kx] = m.reshape(HW)
    masks_f = jnp.asarray(masks_np)
    masks_r = jnp.asarray(masks_np[::-1].copy())      # tap-reversed order

    # 3x3 conv weights stacked per tap: (2, 9*2P); forward + tap-reversed order
    order = [(ky, kx) for ky in range(3) for kx in range(3)]
    wcat_f = jnp.concatenate([w_flow[:, :, ky, kx] for ky, kx in order], axis=1)
    wcat_r = jnp.concatenate([w_flow[:, :, ky, kx] for ky, kx in order[::-1]], axis=1)

    # base sampling grid of flow_warp (x in row 0, y in row 1), lane-dense
    bx = np.tile(np.linspace(-1.0, 1.0, W, dtype=np.float32), H)
    by = np.repeat(np.linspace(-1.0, 1.0, H, dtype=np.float32), W)
    base = jnp.asarray(np.stack([bx, by], axis=0))    # (2, HW)

    # NCHW -> (N, C, H*W): pure reshape, no transpose needed in this layout
    low_flat = low_nchw.reshape(N, Cl, HW)
    h_flat = h_nchw.reshape(N, Ch, H2W2)

    flops_per_n = 2 * (P * Cl * HW + P * Ch * H2W2 + P * H2W2 * HW
                       + 2 * (18 * P) * HW + P * HW * HW)
    bytes_acc = 4 * (N * (Cl * HW + Ch * H2W2 + P * HW)
                     + H2W2 * HW + 2 * 9 * HW + 2 * HW
                     + 4 * 18 * P + P * Cl + P * Ch)

    # NOTE: the grid-invariant constants below total < 150 KB after removing
    # the old (9,HW,HW) shift matrices, so double-buffering them is immaterial;
    # at larger constant sizes they would get pipeline_mode=pl.Buffered(1).
    out_flat = pl.pallas_call(
        functools.partial(_align_kernel, H=H, W=W),
        out_shape=jax.ShapeDtypeStruct((N, P, HW), jnp.float32),
        grid_spec=pltpu.PrefetchScalarGridSpec(
            num_scalar_prefetch=0,
            grid=(N,),
            in_specs=[
                pl.BlockSpec((1, Cl, HW), lambda n: (n, 0, 0)),
                pl.BlockSpec((1, Ch, H2W2), lambda n: (n, 0, 0)),
                pl.BlockSpec((P, Cl), lambda n: (0, 0)),
                pl.BlockSpec((P, Ch), lambda n: (0, 0)),
                pl.BlockSpec((H2W2, HW), lambda n: (0, 0)),
                pl.BlockSpec((2, 18 * P), lambda n: (0, 0)),
                pl.BlockSpec((2, 18 * P), lambda n: (0, 0)),
                pl.BlockSpec((9, HW), lambda n: (0, 0)),
                pl.BlockSpec((9, HW), lambda n: (0, 0)),
                pl.BlockSpec((2, HW), lambda n: (0, 0)),
            ],
            out_specs=pl.BlockSpec((1, P, HW), lambda n: (n, 0, 0)),
        ),
        compiler_params=pltpu.CompilerParams(
            dimension_semantics=("parallel",),
            vmem_limit_bytes=32 * 1024 * 1024,
        ),
        cost_estimate=pl.CostEstimate(
            flops=N * flops_per_n, transcendentals=0, bytes_accessed=bytes_acc),
    )(low_flat, h_flat, wl, wh, mupT, wcat_f, wcat_r, masks_f, masks_r, base)

    return out_flat.reshape(N, P, H, W)   # NCHW, no transpose needed


# ----------------------------------------------------------------------------
# pure-JAX reference (independent formulation) for a sanity check
# ----------------------------------------------------------------------------
def _reference(low_nchw, h_nchw, w_down_l, w_down_h, w_flow):
    N, Cl, H, W = low_nchw.shape
    _, Ch, H2, W2 = h_nchw.shape
    P = w_down_l.shape[0]
    hi = jax.lax.Precision.HIGHEST
    low_p = jnp.einsum('nchw,oc->nohw', low_nchw, w_down_l[:, :, 0, 0], precision=hi)
    h_p = jnp.einsum('nchw,oc->nohw', h_nchw, w_down_h[:, :, 0, 0], precision=hi)
    A_h = jnp.asarray(_interp_matrix(H, H2))
    A_w = jnp.asarray(_interp_matrix(W, W2))
    h_up = jnp.einsum('iy,ncyx,jx->ncij', A_h, h_p, A_w, precision=hi)
    cat = jnp.concatenate([h_up, low_p], axis=1)
    flow = jax.lax.conv_general_dilated(
        cat, w_flow, (1, 1), ((1, 1), (1, 1)),
        dimension_numbers=('NCHW', 'OIHW', 'NCHW'), precision=hi)

    base_x = jnp.linspace(-1.0, 1.0, W)
    base_y = jnp.linspace(-1.0, 1.0, H)
    gx = base_x[None, None, :] + flow[:, 0] / W
    gy = base_y[None, :, None] + flow[:, 1] / H
    xs = ((gx + 1.0) * W - 1.0) / 2.0
    ys = ((gy + 1.0) * H - 1.0) / 2.0
    x0 = jnp.floor(xs)
    y0 = jnp.floor(ys)
    x1 = x0 + 1.0
    y1 = y0 + 1.0
    wx1 = xs - x0
    wx0 = 1.0 - wx1
    wy1 = ys - y0
    wy0 = 1.0 - wy1
    flat = h_up.reshape(N, P, H * W)

    def sample(yc, xc, wgt):
        valid = ((xc >= 0) & (xc < W) & (yc >= 0) & (yc < H)).astype(h_up.dtype)
        idx = (jnp.clip(yc, 0, H - 1) * W + jnp.clip(xc, 0, W - 1)).astype(jnp.int32)
        idx_b = jnp.broadcast_to(idx.reshape(N, 1, H * W), (N, P, H * W))
        vals = jnp.take_along_axis(flat, idx_b, axis=2).reshape(N, P, H, W)
        return vals * (wgt * valid)[:, None]

    return (sample(y0, x0, wy0 * wx0) + sample(y0, x1, wy0 * wx1) +
            sample(y1, x0, wy1 * wx0) + sample(y1, x1, wy1 * wx1))


if __name__ == "__main__":
    N, Cl, Ch, P = 2, 4, 8, 8
    H, W = 16, 16           # low_feature spatial size (output size)
    H2, W2 = 8, 8           # h_feature spatial size

    key = jax.random.PRNGKey(0)
    k1, k2, k3, k4, k5 = jax.random.split(key, 5)
    low = jax.random.normal(k1, (N, Cl, H, W), jnp.float32)
    hfe = jax.random.normal(k2, (N, Ch, H2, W2), jnp.float32)
    # deterministic synthetic parameters (conv weights, bias=False everywhere)
    w_down_l = jax.random.normal(k3, (P, Cl, 1, 1), jnp.float32) / math.sqrt(Cl)
    w_down_h = jax.random.normal(k4, (P, Ch, 1, 1), jnp.float32) / math.sqrt(Ch)
    w_flow = jax.random.normal(k5, (2, 2 * P, 3, 3), jnp.float32) / math.sqrt(2 * P * 9)

    out = align_module_segmap(low, hfe, w_down_l, w_down_h, w_flow)
    out = jax.block_until_ready(out)
    assert out.shape == (N, P, H, W)

    ref = jax.block_until_ready(_reference(low, hfe, w_down_l, w_down_h, w_flow))
    err = float(jnp.max(jnp.abs(out - ref)))
    if err > 5e-3:
        raise AssertionError(f"Pallas kernel mismatch vs reference: max abs err {err}")
    print("KERNEL_OK")
</pallas_src>

<mosaic_0001>
module attributes {stable_mosaic.version = 11 : i64} {
  func.func @_align_kernel(%arg0: i32, %arg1: memref<1x4x256xf32, #tpu.memory_space<vmem>>, %arg2: memref<1x8x64xf32, #tpu.memory_space<vmem>>, %arg3: memref<8x4xf32, #tpu.memory_space<vmem>>, %arg4: memref<8x8xf32, #tpu.memory_space<vmem>>, %arg5: memref<64x256xf32, #tpu.memory_space<vmem>>, %arg6: memref<2x144xf32, #tpu.memory_space<vmem>>, %arg7: memref<2x144xf32, #tpu.memory_space<vmem>>, %arg8: memref<9x256xf32, #tpu.memory_space<vmem>>, %arg9: memref<9x256xf32, #tpu.memory_space<vmem>>, %arg10: memref<2x256xf32, #tpu.memory_space<vmem>>, %arg11: memref<1x8x256xf32, #tpu.memory_space<vmem>>) attributes {dimension_semantics = [#tpu.dimension_semantics<parallel>], iteration_bounds = array<i64: 2>, scalar_prefetch = 0 : i64, scratch_operands = 0 : i64, tpu.core_type = #tpu.core_type<tc>, window_params = [{transform_indices = @transform_0, window_bounds = array<i64: 1, 4, 256>}, {transform_indices = @transform_1, window_bounds = array<i64: 1, 8, 64>}, {pipeline_mode = #tpu.pipeline_mode<synchronous>, transform_indices = @transform_2, window_bounds = array<i64: 8, 4>}, {pipeline_mode = #tpu.pipeline_mode<synchronous>, transform_indices = @transform_3, window_bounds = array<i64: 8, 8>}, {pipeline_mode = #tpu.pipeline_mode<synchronous>, transform_indices = @transform_4, window_bounds = array<i64: 64, 256>}, {pipeline_mode = #tpu.pipeline_mode<synchronous>, transform_indices = @transform_5, window_bounds = array<i64: 2, 144>}, {pipeline_mode = #tpu.pipeline_mode<synchronous>, transform_indices = @transform_6, window_bounds = array<i64: 2, 144>}, {pipeline_mode = #tpu.pipeline_mode<synchronous>, transform_indices = @transform_7, window_bounds = array<i64: 9, 256>}, {pipeline_mode = #tpu.pipeline_mode<synchronous>, transform_indices = @transform_8, window_bounds = array<i64: 9, 256>}, {pipeline_mode = #tpu.pipeline_mode<synchronous>, transform_indices = @transform_9, window_bounds = array<i64: 2, 256>}, {transform_indices = @transform_10, window_bounds = array<i64: 1, 8, 256>}]} {
    %c0 = arith.constant 0 : index
    %c0_0 = arith.constant 0 : index
    %c0_1 = arith.constant 0 : index
    %0 = vector.load %arg1[%c0, %c0_0, %c0_1] : memref<1x4x256xf32, #tpu.memory_space<vmem>>, vector<1x4x256xf32>
    %1 = vector.shape_cast %0 : vector<1x4x256xf32> to vector<4x256xf32>
    %c0_2 = arith.constant 0 : index
    %c0_3 = arith.constant 0 : index
    %c0_4 = arith.constant 0 : index
    %2 = vector.load %arg2[%c0_2, %c0_3, %c0_4] : memref<1x8x64xf32, #tpu.memory_space<vmem>>, vector<1x8x64xf32>
    %3 = vector.shape_cast %2 : vector<1x8x64xf32> to vector<8x64xf32>
    %c0_5 = arith.constant 0 : index
    %c0_6 = arith.constant 0 : index
    %4 = vector.load %arg3[%c0_5, %c0_6] : memref<8x4xf32, #tpu.memory_space<vmem>>, vector<8x4xf32>
    %cst = arith.constant dense<0.000000e+00> : vector<8x256xf32>
    %5 = tpu.matmul %4, %1, %cst {dimension_numbers = #tpu.dot_dimension_numbers<[1], [0], [0], [1], [0, 0, 1, 1], [], []>} : vector<8x4xf32>, vector<4x256xf32>, vector<8x256xf32> -> vector<8x256xf32>
    %c0_7 = arith.constant 0 : index
    %c0_8 = arith.constant 0 : index
    %6 = vector.load %arg4[%c0_7, %c0_8] : memref<8x8xf32, #tpu.memory_space<vmem>>, vector<8x8xf32>
    %cst_9 = arith.constant dense<0.000000e+00> : vector<8x64xf32>
    %7 = tpu.matmul %6, %3, %cst_9 {dimension_numbers = #tpu.dot_dimension_numbers<[1], [0], [0], [1], [0, 0, 1, 1], [], []>} : vector<8x8xf32>, vector<8x64xf32>, vector<8x64xf32> -> vector<8x64xf32>
    %c0_10 = arith.constant 0 : index
    %c0_11 = arith.constant 0 : index
    %8 = vector.load %arg5[%c0_10, %c0_11] : memref<64x256xf32, #tpu.memory_space<vmem>>, vector<64x256xf32>
    %cst_12 = arith.constant dense<0.000000e+00> : vector<8x256xf32>
    %9 = tpu.matmul %7, %8, %cst_12 {dimension_numbers = #tpu.dot_dimension_numbers<[1], [0], [0], [1], [0, 0, 1, 1], [], []>} : vector<8x64xf32>, vector<64x256xf32>, vector<8x256xf32> -> vector<8x256xf32>
    %10 = tpu.iota {dimensions = array<i32: 1>} : vector<8x128xi32>
    %c1_i32 = arith.constant 1 : i32
    %11 = tpu.dynamic_rotate %10 by %c1_i32 dim 1 : vector<8x128xi32>, i32 -> vector<8x128xi32>
    %12 = vector.extract_strided_slice %11 {offsets = [0, 0], sizes = [1, 1], strides = [1, 1]} : vector<8x128xi32> to vector<1x1xi32>
    %c127_i32 = arith.constant 127 : i32
    %13 = vector.broadcast %c127_i32 : i32 to vector<1x1xi32>
    %14 = arith.cmpi eq, %12, %13 : vector<1x1xi32>
    %c0_13 = arith.constant 0 : index
    %c0_14 = arith.constant 0 : index
    %15 = vector.load %arg8[%c0_13, %c0_14] : memref<9x256xf32, #tpu.memory_space<vmem>>, vector<9x256xf32>
    %c0_15 = arith.constant 0 : index
    %c0_16 = arith.constant 0 : index
    %16 = vector.load %arg9[%c0_15, %c0_16] : memref<9x256xf32, #tpu.memory_space<vmem>>, vector<9x256xf32>
    %17 = vector.shape_cast %14 : vector<1x1xi1> to vector<1x1xi1>
    %18 = vector.broadcast %17 : vector<1x1xi1> to vector<9x256xi1>
    %19 = arith.select %18, %15, %16 : vector<9x256xi1>, vector<9x256xf32>
    %c0_17 = arith.constant 0 : index
    %c0_18 = arith.constant 0 : index
    %20 = vector.load %arg6[%c0_17, %c0_18] : memref<2x144xf32, #tpu.memory_space<vmem>>, vector<2x144xf32>
    %c0_19 = arith.constant 0 : index
    %c0_20 = arith.constant 0 : index
    %21 = vector.load %arg7[%c0_19, %c0_20] : memref<2x144xf32, #tpu.memory_space<vmem>>, vector<2x144xf32>
    %22 = vector.shape_cast %14 : vector<1x1xi1> to vector<1x1xi1>
    %23 = vector.broadcast %22 : vector<1x1xi1> to vector<2x144xi1>
    %24 = arith.select %23, %20, %21 : vector<2x144xi1>, vector<2x144xf32>
    %25 = tpu.concatenate %9, %5 in 0 : vector<8x256xf32>, vector<8x256xf32> -> vector<16x256xf32>
    %c17_i32 = arith.constant 17 : i32
    %26 = tpu.dynamic_rotate %25 by %c17_i32 dim 1 : vector<16x256xf32>, i32 -> vector<16x256xf32>
    %27 = vector.extract_strided_slice %19 {offsets = [0, 0], sizes = [1, 256], strides = [1, 1]} : vector<9x256xf32> to vector<1x256xf32>
    %28 = vector.broadcast %27 : vector<1x256xf32> to vector<16x256xf32>
    %29 = arith.mulf %26, %28 : vector<16x256xf32>
    %c16_i32 = arith.constant 16 : i32
    %30 = tpu.dynamic_rotate %25 by %c16_i32 dim 1 : vector<16x256xf32>, i32 -> vector<16x256xf32>
    %31 = vector.extract_strided_slice %19 {offsets = [1, 0], sizes = [1, 256], strides = [1, 1]} : vector<9x256xf32> to vector<1x256xf32>
    %32 = vector.broadcast %31 : vector<1x256xf32> to vector<16x256xf32>
    %33 = arith.mulf %30, %32 : vector<16x256xf32>
    %c15_i32 = arith.constant 15 : i32
    %34 = tpu.dynamic_rotate %25 by %c15_i32 dim 1 : vector<16x256xf32>, i32 -> vector<16x256xf32>
    %35 = vector.extract_strided_slice %19 {offsets = [2, 0], sizes = [1, 256], strides = [1, 1]} : vector<9x256xf32> to vector<1x256xf32>
    %36 = vector.broadcast %35 : vector<1x256xf32> to vector<16x256xf32>
    %37 = arith.mulf %34, %36 : vector<16x256xf32>
    %c1_i32_21 = arith.constant 1 : i32
    %38 = tpu.dynamic_rotate %25 by %c1_i32_21 dim 1 : vector<16x256xf32>, i32 -> vector<16x256xf32>
    %39 = vector.extract_strided_slice %19 {offsets = [3, 0], sizes = [1, 256], strides = [1, 1]} : vector<9x256xf32> to vector<1x256xf32>
    %40 = vector.broadcast %39 : vector<1x256xf32> to vector<16x256xf32>
    %41 = arith.mulf %38, %40 : vector<16x256xf32>
    %42 = vector.extract_strided_slice %19 {offsets = [4, 0], sizes = [1, 256], strides = [1, 1]} : vector<9x256xf32> to vector<1x256xf32>
    %43 = vector.broadcast %42 : vector<1x256xf32> to vector<16x256xf32>
    %44 = arith.mulf %25, %43 : vector<16x256xf32>
    %c255_i32 = arith.constant 255 : i32
    %45 = tpu.dynamic_rotate %25 by %c255_i32 dim 1 : vector<16x256xf32>, i32 -> vector<16x256xf32>
    %46 = vector.extract_strided_slice %19 {offsets = [5, 0], sizes = [1, 256], strides = [1, 1]} : vector<9x256xf32> to vector<1x256xf32>
    %47 = vector.broadcast %46 : vector<1x256xf32> to vector<16x256xf32>
    %48 = arith.mulf %45, %47 : vector<16x256xf32>
    %c241_i32 = arith.constant 241 : i32
    %49 = tpu.dynamic_rotate %25 by %c241_i32 dim 1 : vector<16x256xf32>, i32 -> vector<16x256xf32>
    %50 = vector.extract_strided_slice %19 {offsets = [6, 0], sizes = [1, 256], strides = [1, 1]} : vector<9x256xf32> to vector<1x256xf32>
    %51 = vector.broadcast %50 : vector<1x256xf32> to vector<16x256xf32>
    %52 = arith.mulf %49, %51 : vector<16x256xf32>
    %c240_i32 = arith.constant 240 : i32
    %53 = tpu.dynamic_rotate %25 by %c240_i32 dim 1 : vector<16x256xf32>, i32 -> vector<16x256xf32>
    %54 = vector.extract_strided_slice %19 {offsets = [7, 0], sizes = [1, 256], strides = [1, 1]} : vector<9x256xf32> to vector<1x256xf32>
    %55 = vector.broadcast %54 : vector<1x256xf32> to vector<16x256xf32>
    %56 = arith.mulf %53, %55 : vector<16x256xf32>
    %c239_i32 = arith.constant 239 : i32
    %57 = tpu.dynamic_rotate %25 by %c239_i32 dim 1 : vector<16x256xf32>, i32 -> vector<16x256xf32>
    %58 = vector.extract_strided_slice %19 {offsets = [8, 0], sizes = [1, 256], strides = [1, 1]} : vector<9x256xf32> to vector<1x256xf32>
    %59 = vector.broadcast %58 : vector<1x256xf32> to vector<16x256xf32>
    %60 = arith.mulf %57, %59 : vector<16x256xf32>
    %61 = tpu.concatenate %29, %33, %37, %41, %44, %48, %52, %56, %60 in 0 : vector<16x256xf32>, vector<16x256xf32>, vector<16x256xf32>, vector<16x256xf32>, vector<16x256xf32>, vector<16x256xf32>, vector<16x256xf32>, vector<16x256xf32>, vector<16x256xf32> -> vector<144x256xf32>
    %cst_22 = arith.constant dense<0.000000e+00> : vector<2x256xf32>
    %62 = tpu.matmul %24, %61, %cst_22 {dimension_numbers = #tpu.dot_dimension_numbers<[1], [0], [0], [1], [0, 0, 1, 1], [], []>} : vector<2x144xf32>, vector<144x256xf32>, vector<2x256xf32> -> vector<2x256xf32>
    %c0_23 = arith.constant 0 : index
    %c0_24 = arith.constant 0 : index
    %63 = vector.load %arg10[%c0_23, %c0_24] : memref<2x256xf32, #tpu.memory_space<vmem>>, vector<2x256xf32>
    %64 = vector.extract_strided_slice %63 {offsets = [0, 0], sizes = [1, 256], strides = [1, 1]} : vector<2x256xf32> to vector<1x256xf32>
    %65 = vector.extract_strided_slice %62 {offsets = [0, 0], sizes = [1, 256], strides = [1, 1]} : vector<2x256xf32> to vector<1x256xf32>
    %cst_25 = arith.constant 6.250000e-02 : f32
    %66 = vector.broadcast %cst_25 : f32 to vector<1x256xf32>
    %67 = arith.mulf %65, %66 : vector<1x256xf32>
    %68 = arith.addf %64, %67 : vector<1x256xf32>
    %69 = vector.extract_strided_slice %63 {offsets = [1, 0], sizes = [1, 256], strides = [1, 1]} : vector<2x256xf32> to vector<1x256xf32>
    %70 = vector.extract_strided_slice %62 {offsets = [1, 0], sizes = [1, 256], strides = [1, 1]} : vector<2x256xf32> to vector<1x256xf32>
    %cst_26 = arith.constant 6.250000e-02 : f32
    %71 = vector.broadcast %cst_26 : f32 to vector<1x256xf32>
    %72 = arith.mulf %70, %71 : vector<1x256xf32>
    %73 = arith.addf %69, %72 : vector<1x256xf32>
    %cst_27 = arith.constant 1.000000e+00 : f32
    %74 = vector.broadcast %cst_27 : f32 to vector<1x256xf32>
    %75 = arith.addf %68, %74 : vector<1x256xf32>
    %cst_28 = arith.constant 8.000000e+00 : f32
    %76 = vector.broadcast %cst_28 : f32 to vector<1x256xf32>
    %77 = arith.mulf %75, %76 : vector<1x256xf32>
    %cst_29 = arith.constant 5.000000e-01 : f32
    %78 = vector.broadcast %cst_29 : f32 to vector<1x256xf32>
    %79 = arith.subf %77, %78 : vector<1x256xf32>
    %cst_30 = arith.constant 1.000000e+00 : f32
    %80 = vector.broadcast %cst_30 : f32 to vector<1x256xf32>
    %81 = arith.addf %73, %80 : vector<1x256xf32>
    %cst_31 = arith.constant 8.000000e+00 : f32
    %82 = vector.broadcast %cst_31 : f32 to vector<1x256xf32>
    %83 = arith.mulf %81, %82 : vector<1x256xf32>
    %cst_32 = arith.constant 5.000000e-01 : f32
    %84 = vector.broadcast %cst_32 : f32 to vector<1x256xf32>
    %85 = arith.subf %83, %84 : vector<1x256xf32>
    %86 = math.floor %79 : vector<1x256xf32>
    %87 = math.floor %85 : vector<1x256xf32>
    %88 = arith.subf %79, %86 : vector<1x256xf32>
    %cst_33 = arith.constant 1.000000e+00 : f32
    %89 = vector.broadcast %cst_33 : f32 to vector<1x256xf32>
    %90 = arith.subf %89, %88 : vector<1x256xf32>
    %91 = arith.subf %85, %87 : vector<1x256xf32>
    %cst_34 = arith.constant 1.000000e+00 : f32
    %92 = vector.broadcast %cst_34 : f32 to vector<1x256xf32>
    %93 = arith.subf %92, %91 : vector<1x256xf32>
    %94 = arith.fptosi %86 : vector<1x256xf32> to vector<1x256xi32>
    %95 = arith.fptosi %87 : vector<1x256xf32> to vector<1x256xi32>
    %c1_i32_35 = arith.constant 1 : i32
    %96 = vector.broadcast %c1_i32_35 : i32 to vector<1x256xi32>
    %97 = arith.addi %94, %96 : vector<1x256xi32>
    %c1_i32_36 = arith.constant 1 : i32
    %98 = vector.broadcast %c1_i32_36 : i32 to vector<1x256xi32>
    %99 = arith.addi %95, %98 : vector<1x256xi32>
    %100 = tpu.iota {dimensions = array<i32: 0>} : vector<256x256xi32>
    %101 = arith.mulf %93, %90 : vector<1x256xf32>
    %c0_i32 = arith.constant 0 : i32
    %102 = vector.broadcast %c0_i32 : i32 to vector<1x256xi32>
    %103 = arith.cmpi sge, %94, %102 : vector<1x256xi32>
    %c16_i32_37 = arith.constant 16 : i32
    %104 = vector.broadcast %c16_i32_37 : i32 to vector<1x256xi32>
    %105 = arith.cmpi slt, %94, %104 : vector<1x256xi32>
    %106 = arith.andi %103, %105 : vector<1x256xi1>
    %c0_i32_38 = arith.constant 0 : i32
    %107 = vector.broadcast %c0_i32_38 : i32 to vector<1x256xi32>
    %108 = arith.cmpi sge, %95, %107 : vector<1x256xi32>
    %109 = arith.andi %106, %108 : vector<1x256xi1>
    %c16_i32_39 = arith.constant 16 : i32
    %110 = vector.broadcast %c16_i32_39 : i32 to vector<1x256xi32>
    %111 = arith.cmpi slt, %95, %110 : vector<1x256xi32>
    %112 = arith.andi %109, %111 : vector<1x256xi1>
    %c16_i32_40 = arith.constant 16 : i32
    %113 = vector.broadcast %c16_i32_40 : i32 to vector<1x256xi32>
    %114 = arith.muli %95, %113 : vector<1x256xi32>
    %115 = arith.addi %114, %94 : vector<1x256xi32>
    %116 = vector.broadcast %115 : vector<1x256xi32> to vector<256x256xi32>
    %117 = arith.cmpi eq, %100, %116 : vector<256x256xi32>
    %118 = vector.broadcast %112 : vector<1x256xi1> to vector<256x256xi1>
    %119 = arith.andi %117, %118 : vector<256x256xi1>
    %cst_41 = arith.constant 0.000000e+00 : f32
    %120 = vector.shape_cast %101 : vector<1x256xf32> to vector<1x256xf32>
    %121 = vector.broadcast %120 : vector<1x256xf32> to vector<256x256xf32>
    %122 = vector.broadcast %cst_41 : f32 to vector<256x256xf32>
    %123 = arith.select %119, %121, %122 : vector<256x256xi1>, vector<256x256xf32>
    %124 = arith.mulf %93, %88 : vector<1x256xf32>
    %c0_i32_42 = arith.constant 0 : i32
    %125 = vector.broadcast %c0_i32_42 : i32 to vector<1x256xi32>
    %126 = arith.cmpi sge, %97, %125 : vector<1x256xi32>
    %c16_i32_43 = arith.constant 16 : i32
    %127 = vector.broadcast %c16_i32_43 : i32 to vector<1x256xi32>
    %128 = arith.cmpi slt, %97, %127 : vector<1x256xi32>
    %129 = arith.andi %126, %128 : vector<1x256xi1>
    %c0_i32_44 = arith.constant 0 : i32
    %130 = vector.broadcast %c0_i32_44 : i32 to vector<1x256xi32>
    %131 = arith.cmpi sge, %95, %130 : vector<1x256xi32>
    %132 = arith.andi %129, %131 : vector<1x256xi1>
    %c16_i32_45 = arith.constant 16 : i32
    %133 = vector.broadcast %c16_i32_45 : i32 to vector<1x256xi32>
    %134 = arith.cmpi slt, %95, %133 : vector<1x256xi32>
    %135 = arith.andi %132, %134 : vector<1x256xi1>
    %c16_i32_46 = arith.constant 16 : i32
    %136 = vector.broadcast %c16_i32_46 : i32 to vector<1x256xi32>
    %137 = arith.muli %95, %136 : vector<1x256xi32>
    %138 = arith.addi %137, %97 : vector<1x256xi32>
    %139 = vector.broadcast %138 : vector<1x256xi32> to vector<256x256xi32>
    %140 = arith.cmpi eq, %100, %139 : vector<256x256xi32>
    %141 = vector.broadcast %135 : vector<1x256xi1> to vector<256x256xi1>
    %142 = arith.andi %140, %141 : vector<256x256xi1>
    %cst_47 = arith.constant 0.000000e+00 : f32
    %143 = vector.shape_cast %124 : vector<1x256xf32> to vector<1x256xf32>
    %144 = vector.broadcast %143 : vector<1x256xf32> to vector<256x256xf32>
    %145 = vector.broadcast %cst_47 : f32 to vector<256x256xf32>
    %146 = arith.select %142, %144, %145 : vector<256x256xi1>, vector<256x256xf32>
    %147 = arith.addf %123, %146 : vector<256x256xf32>
    %148 = arith.mulf %91, %90 : vector<1x256xf32>
    %c0_i32_48 = arith.constant 0 : i32
    %149 = vector.broadcast %c0_i32_48 : i32 to vector<1x256xi32>
    %150 = arith.cmpi sge, %94, %149 : vector<1x256xi32>
    %c16_i32_49 = arith.constant 16 : i32
    %151 = vector.broadcast %c16_i32_49 : i32 to vector<1x256xi32>
    %152 = arith.cmpi slt, %94, %151 : vector<1x256xi32>
    %153 = arith.andi %150, %152 : vector<1x256xi1>
    %c0_i32_50 = arith.constant 0 : i32
    %154 = vector.broadcast %c0_i32_50 : i32 to vector<1x256xi32>
    %155 = arith.cmpi sge, %99, %154 : vector<1x256xi32>
    %156 = arith.andi %153, %155 : vector<1x256xi1>
    %c16_i32_51 = arith.constant 16 : i32
    %157 = vector.broadcast %c16_i32_51 : i32 to vector<1x256xi32>
    %158 = arith.cmpi slt, %99, %157 : vector<1x256xi32>
    %159 = arith.andi %156, %158 : vector<1x256xi1>
    %c16_i32_52 = arith.constant 16 : i32
    %160 = vector.broadcast %c16_i32_52 : i32 to vector<1x256xi32>
    %161 = arith.muli %99, %160 : vector<1x256xi32>
    %162 = arith.addi %161, %94 : vector<1x256xi32>
    %163 = vector.broadcast %162 : vector<1x256xi32> to vector<256x256xi32>
    %164 = arith.cmpi eq, %100, %163 : vector<256x256xi32>
    %165 = vector.broadcast %159 : vector<1x256xi1> to vector<256x256xi1>
    %166 = arith.andi %164, %165 : vector<256x256xi1>
    %cst_53 = arith.constant 0.000000e+00 : f32
    %167 = vector.shape_cast %148 : vector<1x256xf32> to vector<1x256xf32>
    %168 = vector.broadcast %167 : vector<1x256xf32> to vector<256x256xf32>
    %169 = vector.broadcast %cst_53 : f32 to vector<256x256xf32>
    %170 = arith.select %166, %168, %169 : vector<256x256xi1>, vector<256x256xf32>
    %171 = arith.addf %147, %170 : vector<256x256xf32>
    %172 = arith.mulf %91, %88 : vector<1x256xf32>
    %c0_i32_54 = arith.constant 0 : i32
    %173 = vector.broadcast %c0_i32_54 : i32 to vector<1x256xi32>
    %174 = arith.cmpi sge, %97, %173 : vector<1x256xi32>
    %c16_i32_55 = arith.constant 16 : i32
    %175 = vector.broadcast %c16_i32_55 : i32 to vector<1x256xi32>
    %176 = arith.cmpi slt, %97, %175 : vector<1x256xi32>
    %177 = arith.andi %174, %176 : vector<1x256xi1>
    %c0_i32_56 = arith.constant 0 : i32
    %178 = vector.broadcast %c0_i32_56 : i32 to vector<1x256xi32>
    %179 = arith.cmpi sge, %99, %178 : vector<1x256xi32>
    %180 = arith.andi %177, %179 : vector<1x256xi1>
    %c16_i32_57 = arith.constant 16 : i32
    %181 = vector.broadcast %c16_i32_57 : i32 to vector<1x256xi32>
    %182 = arith.cmpi slt, %99, %181 : vector<1x256xi32>
    %183 = arith.andi %180, %182 : vector<1x256xi1>
    %c16_i32_58 = arith.constant 16 : i32
    %184 = vector.broadcast %c16_i32_58 : i32 to vector<1x256xi32>
    %185 = arith.muli %99, %184 : vector<1x256xi32>
    %186 = arith.addi %185, %97 : vector<1x256xi32>
    %187 = vector.broadcast %186 : vector<1x256xi32> to vector<256x256xi32>
    %188 = arith.cmpi eq, %100, %187 : vector<256x256xi32>
    %189 = vector.broadcast %183 : vector<1x256xi1> to vector<256x256xi1>
    %190 = arith.andi %188, %189 : vector<256x256xi1>
    %cst_59 = arith.constant 0.000000e+00 : f32
    %191 = vector.shape_cast %172 : vector<1x256xf32> to vector<1x256xf32>
    %192 = vector.broadcast %191 : vector<1x256xf32> to vector<256x256xf32>
    %193 = vector.broadcast %cst_59 : f32 to vector<256x256xf32>
    %194 = arith.select %190, %192, %193 : vector<256x256xi1>, vector<256x256xf32>
    %195 = arith.addf %171, %194 : vector<256x256xf32>
    %cst_60 = arith.constant dense<0.000000e+00> : vector<8x256xf32>
    %196 = tpu.matmul %9, %195, %cst_60 {dimension_numbers = #tpu.dot_dimension_numbers<[1], [0], [0], [1], [0, 0, 1, 1], [], []>} : vector<8x256xf32>, vector<256x256xf32>, vector<8x256xf32> -> vector<8x256xf32>
    %c0_61 = arith.constant 0 : index
    %c0_62 = arith.constant 0 : index
    %c0_63 = arith.constant 0 : index
    %197 = vector.load %arg11[%c0_61, %c0_62, %c0_63] : memref<1x8x256xf32, #tpu.memory_space<vmem>>, vector<1x8x256xf32>
    %198 = vector.shape_cast %197 : vector<1x8x256xf32> to vector<8x256xf32>
    %199 = vector.shape_cast %196 : vector<8x256xf32> to vector<1x8x256xf32>
    tpu.vector_store %arg11[%c0_61, %c0_62, %c0_63], %199 {strides = array<i32>} : memref<1x8x256xf32, #tpu.memory_space<vmem>>, vector<1x8x256xf32>,
    return
  }
  func.func @transform_0(%arg0: i32) -> (i32, i32, i32) {
    %c0_i32 = arith.constant 0 : i32
    %c0_i32_0 = arith.constant 0 : i32
    %c0_i32_1 = arith.constant 0 : i32
    return %arg0, %c0_i32, %c0_i32_0 : i32, i32, i32
  }
  func.func @transform_1(%arg0: i32) -> (i32, i32, i32) {
    %c0_i32 = arith.constant 0 : i32
    %c0_i32_0 = arith.constant 0 : i32
    %c0_i32_1 = arith.constant 0 : i32
    return %arg0, %c0_i32, %c0_i32_0 : i32, i32, i32
  }
  func.func @transform_2(%arg0: i32) -> (i32, i32) {
    %c0_i32 = arith.constant 0 : i32
    %c0_i32_0 = arith.constant 0 : i32
    %c0_i32_1 = arith.constant 0 : i32
    return %c0_i32, %c0_i32_0 : i32, i32
  }
  func.func @transform_3(%arg0: i32) -> (i32, i32) {
    %c0_i32 = arith.constant 0 : i32
    %c0_i32_0 = arith.constant 0 : i32
    %c0_i32_1 = arith.constant 0 : i32
    return %c0_i32, %c0_i32_0 : i32, i32
  }
  func.func @transform_4(%arg0: i32) -> (i32, i32) {
    %c0_i32 = arith.constant 0 : i32
    %c0_i32_0 = arith.constant 0 : i32
    %c0_i32_1 = arith.constant 0 : i32
    return %c0_i32, %c0_i32_0 : i32, i32
  }
  func.func @transform_5(%arg0: i32) -> (i32, i32) {
    %c0_i32 = arith.constant 0 : i32
    %c0_i32_0 = arith.constant 0 : i32
    %c0_i32_1 = arith.constant 0 : i32
    return %c0_i32, %c0_i32_0 : i32, i32
  }
  func.func @transform_6(%arg0: i32) -> (i32, i32) {
    %c0_i32 = arith.constant 0 : i32
    %c0_i32_0 = arith.constant 0 : i32
    %c0_i32_1 = arith.constant 0 : i32
    return %c0_i32, %c0_i32_0 : i32, i32
  }
  func.func @transform_7(%arg0: i32) -> (i32, i32) {
    %c0_i32 = arith.constant 0 : i32
    %c0_i32_0 = arith.constant 0 : i32
    %c0_i32_1 = arith.constant 0 : i32
    return %c0_i32, %c0_i32_0 : i32, i32
  }
  func.func @transform_8(%arg0: i32) -> (i32, i32) {
    %c0_i32 = arith.constant 0 : i32
    %c0_i32_0 = arith.constant 0 : i32
    %c0_i32_1 = arith.constant 0 : i32
    return %c0_i32, %c0_i32_0 : i32, i32
  }
  func.func @transform_9(%arg0: i32) -> (i32, i32) {
    %c0_i32 = arith.constant 0 : i32
    %c0_i32_0 = arith.constant 0 : i32
    %c0_i32_1 = arith.constant 0 : i32
    return %c0_i32, %c0_i32_0 : i32, i32
  }
  func.func @transform_10(%arg0: i32) -> (i32, i32, i32) {
    %c0_i32 = arith.constant 0 : i32
    %c0_i32_0 = arith.constant 0 : i32
    %c0_i32_1 = arith.constant 0 : i32
    return %arg0, %c0_i32, %c0_i32_0 : i32, i32, i32
  }
}

</mosaic_0001>

<llo_original>
// kernel: tpu_custom_call.1
$region0: #{tpu_custom_call.1}
  #allocation0 [shape = 'u32[]', space=smem, size = 0x4, offset = 0x4, fixed_abs, tag = 'smem constant byte address 0x4 - core index']
  #allocation1 [shape = 'u32[144,128]{1,0:T(1,128)}', space=vmem, size = 0x12000, scoped, tag = 'internal scratch']
  %s0 = inlined_call_operand.hbm [shape: f32[2,4,256], index: 0, kind: input, shape index: {}]
  %s1 = inlined_call_operand.hbm [shape: f32[2,8,64], index: 1, kind: input, shape index: {}]
  %s2 = inlined_call_operand.vmem [shape: f32[8,4], index: 2, kind: input, shape index: {}]
  %s3 = inlined_call_operand.hbm [shape: f32[8,8], index: 3, kind: input, shape index: {}]
  %s4 = inlined_call_operand.hbm [shape: f32[64,256], index: 4, kind: input, shape index: {}]
  %s5 = inlined_call_operand.vmem [shape: f32[2,144], index: 5, kind: input, shape index: {}]
  %s6 = inlined_call_operand.hbm [shape: f32[2,144], index: 6, kind: input, shape index: {}]
  %s7 = inlined_call_operand.vmem [shape: f32[9,256], index: 7, kind: input, shape index: {}]
  %s8 = inlined_call_operand.hbm [shape: f32[9,256], index: 8, kind: input, shape index: {}]
  %s9 = inlined_call_operand.vmem [shape: f32[2,256], index: 9, kind: input, shape index: {}]
  %s10 = inlined_call_operand.hbm [shape: f32[2,8,256], index: 10, kind: output, shape index: {}]
  %s11 = sld [smem:[#allocation0]]
  $region97: #{tpu_custom_call.1} parent=0
    _
  %s13 = ssub.s32 1, %s11
  %s14 = scalar_select 0, %s13, %s11
  $region1: #{tpu_custom_call.1} parent=0
    #allocation2 [shape = 'u8[8192]{0}', space=vmem, size = 0x2000, scoped, tag = 'input window, operand 0']
    #allocation3 [shape = 's32[2]{0}', space=sflag, size = 0x8, scoped, tag = 'scoped memory for tpu_custom_call.1']
    #allocation4 [shape = 's32[2]{0}', space=sflag, size = 0x8, scoped, tag = 'scoped memory for tpu_custom_call.1']
    #allocation5 [shape = 'u8[8192]{0}', space=vmem, size = 0x2000, scoped, tag = 'input window, operand 1']
    #allocation6 [shape = 's32[2]{0}', space=sflag, size = 0x8, scoped, tag = 'scoped memory for tpu_custom_call.1']
    #allocation7 [shape = 'u8[4096]{0}', space=vmem, size = 0x1000, scoped, tag = 'input window, operand 3, single buffered']
    #allocation8 [shape = 'u8[65536]{0}', space=vmem, size = 0x10000, scoped, tag = 'input window, operand 4, single buffered']
    #allocation9 [shape = 's32[1]{0}', space=sflag, size = 0x4, scoped, tag = 'scoped memory for tpu_custom_call.1']
    #allocation10 [shape = 'u8[2048]{0}', space=vmem, size = 0x800, scoped, tag = 'input window, operand 6, single buffered']
    #allocation11 [shape = 'u8[16384]{0}', space=vmem, size = 0x4000, scoped, tag = 'input window, operand 8, single buffered']
    #allocation12 [shape = 's32[1]{0}', space=sflag, size = 0x4, scoped, tag = 'scoped memory for tpu_custom_call.1']
    #allocation13 [shape = 'u8[16384]{0}', space=vmem, size = 0x4000, scoped, tag = 'output window, operand 0']
    %15 = vsyncpa [#allocation3], 0
    %s16 = scalar_lea.sflag [#allocation3], 1
    %17 = vsyncpa %s16, 0
    %18 = vsyncpa [#allocation6], 0
    %s19 = scalar_lea.sflag [#allocation6], 1
    %20 = vsyncpa %s19, 0
    %21 = vsyncpa [#allocation9], 0
    %22 = vsyncpa [#allocation12], 0
    %23 = vsyncpa [#allocation4], 0
    %s24 = scalar_lea.sflag [#allocation4], 1
    %25 = vsyncpa %s24, 0
    loop: start=0, step=1, limit=4
    $region2: #{tpu_custom_call.1} parent=1 // loop_pre_header
      _
    $region3: #{tpu_custom_call.1} parent=1 // loop_header
      %s27 = sphi 0, %s31
      %p28 = scmp.ge.s32.totalorder %s27, 4
      %s37 = sphi 0, %s39
      %s40 = sphi 0, %s37
      %s41 = sphi 0, %s40
      %s57 = sphi 0, %s41
      %s63 = sphi 0, %s65
      %s66 = sphi 0, %s63
      %s67 = sphi 0, %s66
      %s83 = sphi 0, %s67
      %s87 = sphi 0, %s87
      %s89 = sphi 0, %s87
      %s90 = sphi 0, %s89
      %s104 = sphi 0, %s90
      %s108 = sphi 0, %s108
      %s110 = sphi 0, %s108
      %s111 = sphi 0, %s110
      %s125 = sphi 0, %s111
      %s129 = sphi 0, %s129
      %s131 = sphi 0, %s129
      %s132 = sphi 0, %s131
      %s146 = sphi 0, %s132
      %s150 = sphi 0, %s150
      %s152 = sphi 0, %s150
      %s153 = sphi 0, %s152
      %s167 = sphi 0, %s153
      %s171 = sphi 0, %s171
      %s173 = sphi 0, %s171
      %s174 = sphi 0, %s173
      %s188 = sphi 0, %s174
      %s192 = sphi 0, %s192
      %s194 = sphi 0, %s192
      %s195 = sphi 0, %s194
      %s209 = sphi 0, %s195
      %s213 = sphi 0, %s213
      %s215 = sphi 0, %s213
      %s216 = sphi 0, %s215
      %s230 = sphi 0, %s216
      %s234 = sphi 0, %s234
      %s236 = sphi 0, %s234
      %s237 = sphi 0, %s236
      %s251 = sphi 0, %s237
      %s257 = sphi 0, %s259
      %s260 = sphi 0, %s257
      %s261 = sphi 0, %s260
      %s277 = sphi 0, %s261
    $region4: #{tpu_custom_call.1} parent=1 // loop_header_branch
      %30 = sbr.rel (%p28) target = $region8
    $region5: #{tpu_custom_call.1} parent=1 // loop_body
      %s32 = ssub.s32 %s27, 1
      %s33 = ssub.s32 %s27, 2
      %s34 = sadd.s32 %s27, 1
      %s35 = ssub.s32 %s27, %s34
      %p36 = scmp.eq.s32.totalorder %s35, 0
      %s38 = sadd.s32 %s37, 1
      %s39 = scalar_select %p36, %s37, %s38
      %p42 = pneg %p36
      %p43 = scmp.eq.s32.totalorder %s27, 1
      %p44 = por %p42, %p43
      %p45 = scmp.ne.s32.totalorder %s37, %s40
      %p46 = scmp.eq.s32.totalorder %s27, 0
      %p47 = por %p45, %p46
      %p48 = scmp.ne.s32.totalorder %s37, %s40
      %p49 = scmp.eq.s32.totalorder %s32, 1
      %p50 = por %p48, %p49
      %p51 = scmp.ne.s32.totalorder %s40, %s41
      %p52 = scmp.eq.s32.totalorder %s32, 0
      %p53 = por %p51, %p52
      %p54 = scmp.ne.s32.totalorder %s40, %s41
      %p55 = scmp.eq.s32.totalorder %s33, 1
      %p56 = por %p54, %p55
      %p58 = scmp.ne.s32.totalorder %s41, %s57
      %p59 = scmp.eq.s32.totalorder %s33, 0
      %p60 = por %p58, %p59
      %s61 = ssub.s32 %s27, %s34
      %p62 = scmp.eq.s32.totalorder %s61, 0
      %s64 = sadd.s32 %s63, 1
      %s65 = scalar_select %p62, %s63, %s64
      %p68 = pneg %p62
      %p69 = scmp.eq.s32.totalorder %s27, 1
      %p70 = por %p68, %p69
      %p71 = scmp.ne.s32.totalorder %s63, %s66
      %p72 = scmp.eq.s32.totalorder %s27, 0
      %p73 = por %p71, %p72
      %p74 = scmp.ne.s32.totalorder %s63, %s66
      %p75 = scmp.eq.s32.totalorder %s32, 1
      %p76 = por %p74, %p75
      %p77 = scmp.ne.s32.totalorder %s66, %s67
      %p78 = scmp.eq.s32.totalorder %s32, 0
      %p79 = por %p77, %p78
      %p80 = scmp.ne.s32.totalorder %s66, %s67
      %p81 = scmp.eq.s32.totalorder %s33, 1
      %p82 = por %p80, %p81
      %p84 = scmp.ne.s32.totalorder %s67, %s83
      %p85 = scmp.eq.s32.totalorder %s33, 0
      %p86 = por %p84, %p85
      %s88 = sadd.s32 %s87, 1
      %p91 = scmp.eq.s32.totalorder %s27, 1
      %p92 = scmp.ne.s32.totalorder %s87, %s89
      %p93 = scmp.eq.s32.totalorder %s27, 0
      %p94 = por %p92, %p93
      %p95 = scmp.ne.s32.totalorder %s87, %s89
      %p96 = scmp.eq.s32.totalorder %s32, 1
      %p97 = por %p95, %p96
      %p98 = scmp.ne.s32.totalorder %s89, %s90
      %p99 = scmp.eq.s32.totalorder %s32, 0
      %p100 = por %p98, %p99
      %p101 = scmp.ne.s32.totalorder %s89, %s90
      %p102 = scmp.eq.s32.totalorder %s33, 1
      %p103 = por %p101, %p102
      %p105 = scmp.ne.s32.totalorder %s90, %s104
      %p106 = scmp.eq.s32.totalorder %s33, 0
      %p107 = por %p105, %p106
      %s109 = sadd.s32 %s108, 1
      %p112 = scmp.eq.s32.totalorder %s27, 1
      %p113 = scmp.ne.s32.totalorder %s108, %s110
      %p114 = scmp.eq.s32.totalorder %s27, 0
      %p115 = por %p113, %p114
      %p116 = scmp.ne.s32.totalorder %s108, %s110
      %p117 = scmp.eq.s32.totalorder %s32, 1
      %p118 = por %p116, %p117
      %p119 = scmp.ne.s32.totalorder %s110, %s111
      %p120 = scmp.eq.s32.totalorder %s32, 0
      %p121 = por %p119, %p120
      %p122 = scmp.ne.s32.totalorder %s110, %s111
      %p123 = scmp.eq.s32.totalorder %s33, 1
      %p124 = por %p122, %p123
      %p126 = scmp.ne.s32.totalorder %s111, %s125
      %p127 = scmp.eq.s32.totalorder %s33, 0
      %p128 = por %p126, %p127
      %s130 = sadd.s32 %s129, 1
      %p133 = scmp.eq.s32.totalorder %s27, 1
      %p134 = scmp.ne.s32.totalorder %s129, %s131
      %p135 = scmp.eq.s32.totalorder %s27, 0
      %p136 = por %p134, %p135
      %p137 = scmp.ne.s32.totalorder %s129, %s131
      %p138 = scmp.eq.s32.totalorder %s32, 1
      %p139 = por %p137, %p138
      %p140 = scmp.ne.s32.totalorder %s131, %s132
      %p141 = scmp.eq.s32.totalorder %s32, 0
      %p142 = por %p140, %p141
      %p143 = scmp.ne.s32.totalorder %s131, %s132
      %p144 = scmp.eq.s32.totalorder %s33, 1
      %p145 = por %p143, %p144
      %p147 = scmp.ne.s32.totalorder %s132, %s146
      %p148 = scmp.eq.s32.totalorder %s33, 0
      %p149 = por %p147, %p148
      %s151 = sadd.s32 %s150, 1
      %p154 = scmp.eq.s32.totalorder %s27, 1
      %p155 = scmp.ne.s32.totalorder %s150, %s152
      %p156 = scmp.eq.s32.totalorder %s27, 0
      %p157 = por %p155, %p156
      %p158 = scmp.ne.s32.totalorder %s150, %s152
      %p159 = scmp.eq.s32.totalorder %s32, 1
      %p160 = por %p158, %p159
      %p161 = scmp.ne.s32.totalorder %s152, %s153
      %p162 = scmp.eq.s32.totalorder %s32, 0
      %p163 = por %p161, %p162
      %p164 = scmp.ne.s32.totalorder %s152, %s153
      %p165 = scmp.eq.s32.totalorder %s33, 1
      %p166 = por %p164, %p165
      %p168 = scmp.ne.s32.totalorder %s153, %s167
      %p169 = scmp.eq.s32.totalorder %s33, 0
      %p170 = por %p168, %p169
      %s172 = sadd.s32 %s171, 1
      %p175 = scmp.eq.s32.totalorder %s27, 1
      %p176 = scmp.ne.s32.totalorder %s171, %s173
      %p177 = scmp.eq.s32.totalorder %s27, 0
      %p178 = por %p176, %p177
      %p179 = scmp.ne.s32.totalorder %s171, %s173
      %p180 = scmp.eq.s32.totalorder %s32, 1
      %p181 = por %p179, %p180
      %p182 = scmp.ne.s32.totalorder %s173, %s174
      %p183 = scmp.eq.s32.totalorder %s32, 0
      %p184 = por %p182, %p183
      %p185 = scmp.ne.s32.totalorder %s173, %s174
      %p186 = scmp.eq.s32.totalorder %s33, 1
      %p187 = por %p185, %p186
      %p189 = scmp.ne.s32.totalorder %s174, %s188
      %p190 = scmp.eq.s32.totalorder %s33, 0
      %p191 = por %p189, %p190
      %s193 = sadd.s32 %s192, 1
      %p196 = scmp.eq.s32.totalorder %s27, 1
      %p197 = scmp.ne.s32.totalorder %s192, %s194
      %p198 = scmp.eq.s32.totalorder %s27, 0
      %p199 = por %p197, %p198
      %p200 = scmp.ne.s32.totalorder %s192, %s194
      %p201 = scmp.eq.s32.totalorder %s32, 1
      %p202 = por %p200, %p201
      %p203 = scmp.ne.s32.totalorder %s194, %s195
      %p204 = scmp.eq.s32.totalorder %s32, 0
      %p205 = por %p203, %p204
      %p206 = scmp.ne.s32.totalorder %s194, %s195
      %p207 = scmp.eq.s32.totalorder %s33, 1
      %p208 = por %p206, %p207
      %p210 = scmp.ne.s32.totalorder %s195, %s209
      %p211 = scmp.eq.s32.totalorder %s33, 0
      %p212 = por %p210, %p211
      %s214 = sadd.s32 %s213, 1
      %p217 = scmp.eq.s32.totalorder %s27, 1
      %p218 = scmp.ne.s32.totalorder %s213, %s215
      %p219 = scmp.eq.s32.totalorder %s27, 0
      %p220 = por %p218, %p219
      %p221 = scmp.ne.s32.totalorder %s213, %s215
      %p222 = scmp.eq.s32.totalorder %s32, 1
      %p223 = por %p221, %p222
      %p224 = scmp.ne.s32.totalorder %s215, %s216
      %p225 = scmp.eq.s32.totalorder %s32, 0
      %p226 = por %p224, %p225
      %p227 = scmp.ne.s32.totalorder %s215, %s216
      %p228 = scmp.eq.s32.totalorder %s33, 1
      %p229 = por %p227, %p228
      %p231 = scmp.ne.s32.totalorder %s216, %s230
      %p232 = scmp.eq.s32.totalorder %s33, 0
      %p233 = por %p231, %p232
      %s235 = sadd.s32 %s234, 1
      %p238 = scmp.eq.s32.totalorder %s27, 1
      %p239 = scmp.ne.s32.totalorder %s234, %s236
      %p240 = scmp.eq.s32.totalorder %s27, 0
      %p241 = por %p239, %p240
      %p242 = scmp.ne.s32.totalorder %s234, %s236
      %p243 = scmp.eq.s32.totalorder %s32, 1
      %p244 = por %p242, %p243
      %p245 = scmp.ne.s32.totalorder %s236, %s237
      %p246 = scmp.eq.s32.totalorder %s32, 0
      %p247 = por %p245, %p246
      %p248 = scmp.ne.s32.totalorder %s236, %s237
      %p249 = scmp.eq.s32.totalorder %s33, 1
      %p250 = por %p248, %p249
      %p252 = scmp.ne.s32.totalorder %s237, %s251
      %p253 = scmp.eq.s32.totalorder %s33, 0
      %p254 = por %p252, %p253
      %s255 = ssub.s32 %s27, %s34
      %p256 = scmp.eq.s32.totalorder %s255, 0
      %s258 = sadd.s32 %s257, 1
      %s259 = scalar_select %p256, %s257, %s258
      %p262 = pneg %p256
      %p263 = scmp.eq.s32.totalorder %s27, 1
      %p264 = por %p262, %p263
      %p265 = scmp.ne.s32.totalorder %s257, %s260
      %p266 = scmp.eq.s32.totalorder %s27, 0
      %p267 = por %p265, %p266
      %p268 = scmp.ne.s32.totalorder %s257, %s260
      %p269 = scmp.eq.s32.totalorder %s32, 1
      %p270 = por %p268, %p269
      %p271 = scmp.ne.s32.totalorder %s260, %s261
      %p272 = scmp.eq.s32.totalorder %s32, 0
      %p273 = por %p271, %p272
      %p274 = scmp.ne.s32.totalorder %s260, %s261
      %p275 = scmp.eq.s32.totalorder %s33, 1
      %p276 = por %p274, %p275
      %p278 = scmp.ne.s32.totalorder %s261, %s277
      %p279 = scmp.eq.s32.totalorder %s33, 0
      %p280 = por %p278, %p279
      %p281 = scmp.le.s32.totalorder 1, %s27
      %p282 = scmp.lt.s32.totalorder %s27, 3
      %p283 = pnand %p281, %p282
      %p284 = pneg %p283
      // Predicated region
      $region9: #{tpu_custom_call.1} parent=5 // pred_check
        _
      $region10: #{tpu_custom_call.1} parent=5 // pred_check_branch
        %286 = sbr.rel (%p283) target = $region12
      $region11: #{tpu_custom_call.1} parent=5 // pred_region
        %s287 = ssub.s32 %s27, 1
        // Predicated region
        $region13: #{tpu_custom_call.1} parent=11 // pred_check
          %p288 = pneg %p100
        $region14: #{tpu_custom_call.1} parent=11 // pred_check_branch
          %290 = sbr.rel (%p288) target = $region16
        $region15: #{tpu_custom_call.1} parent=11 // pred_region
          _
        $region16: #{tpu_custom_call.1} parent=11 // pred_fallthru
          _
        // Predicated region
        $region17: #{tpu_custom_call.1} parent=11 // pred_check
          %p291 = pneg %p121
        $region18: #{tpu_custom_call.1} parent=11 // pred_check_branch
          %293 = sbr.rel (%p291) target = $region20
        $region19: #{tpu_custom_call.1} parent=11 // pred_region
          %s295 = ssub.s32 128, 128
          %296 = vsyncadd [#allocation6], %s295
          %s298 = sshll.u32 [#allocation7], 4
          %s299 = int_to_ptr.vmem [resolvable:$true] %s298
          %301 = dma.hbm_to_vmem [thread:$0]  %s3, 128, %s299, [#allocation6]
        $region20: #{tpu_custom_call.1} parent=11 // pred_fallthru
          _
        // Predicated region
        $region21: #{tpu_custom_call.1} parent=11 // pred_check
          %p302 = pneg %p142
        $region22: #{tpu_custom_call.1} parent=11 // pred_check_branch
          %304 = sbr.rel (%p302) target = $region24
        $region23: #{tpu_custom_call.1} parent=11 // pred_region
          %s306 = ssub.s32 2048, 2048
          %307 = vsyncadd [#allocation9], %s306
          %s308 = sshll.u32 [#allocation8], 4
          %s309 = int_to_ptr.vmem [resolvable:$true] %s308
          %314 = dma.hbm_to_vmem [thread:$0]  %s4, 2048, %s309, [#allocation9], 256, 256, 16
        $region24: #{tpu_custom_call.1} parent=11 // pred_fallthru
          _
        // Predicated region
        $region25: #{tpu_custom_call.1} parent=11 // pred_check
          %p315 = pneg %p163
        $region26: #{tpu_custom_call.1} parent=11 // pred_check_branch
          %317 = sbr.rel (%p315) target = $region28
        $region27: #{tpu_custom_call.1} parent=11 // pred_region
          _
        $region28: #{tpu_custom_call.1} parent=11 // pred_fallthru
          _
        // Predicated region
        $region29: #{tpu_custom_call.1} parent=11 // pred_check
          %p318 = pneg %p184
        $region30: #{tpu_custom_call.1} parent=11 // pred_check_branch
          %320 = sbr.rel (%p318) target = $region32
        $region31: #{tpu_custom_call.1} parent=11 // pred_region
          %s322 = ssub.s32 64, 64
          %323 = vsyncadd [#allocation9], %s322
          %s325 = sshll.u32 [#allocation10], 4
          %s326 = int_to_ptr.vmem [resolvable:$true] %s325
          %328 = dma.hbm_to_vmem [thread:$0]  %s6, 64, %s326, [#allocation9]
        $region32: #{tpu_custom_call.1} parent=11 // pred_fallthru
          _
        // Predicated region
        $region33: #{tpu_custom_call.1} parent=11 // pred_check
          %p329 = pneg %p205
        $region34: #{tpu_custom_call.1} parent=11 // pred_check_branch
          %331 = sbr.rel (%p329) target = $region36
        $region35: #{tpu_custom_call.1} parent=11 // pred_region
          _
        $region36: #{tpu_custom_call.1} parent=11 // pred_fallthru
          _
        // Predicated region
        $region37: #{tpu_custom_call.1} parent=11 // pred_check
          %p332 = pneg %p226
        $region38: #{tpu_custom_call.1} parent=11 // pred_check_branch
          %334 = sbr.rel (%p332) target = $region40
        $region39: #{tpu_custom_call.1} parent=11 // pred_region
          %s336 = ssub.s32 512, 512
          %337 = vsyncadd [#allocation12], %s336
          %s338 = sshll.u32 [#allocation11], 4
          %s339 = int_to_ptr.vmem [resolvable:$true] %s338
          %344 = dma.hbm_to_vmem [thread:$0]  %s8, 512, %s339, [#allocation12], 256, 256, 16
        $region40: #{tpu_custom_call.1} parent=11 // pred_fallthru
          _
        // Predicated region
        $region41: #{tpu_custom_call.1} parent=11 // pred_check
          %p345 = pneg %p247
        $region42: #{tpu_custom_call.1} parent=11 // pred_check_branch
          %347 = sbr.rel (%p345) target = $region44
        $region43: #{tpu_custom_call.1} parent=11 // pred_region
          _
        $region44: #{tpu_custom_call.1} parent=11 // pred_fallthru
          _
      $region12: #{tpu_custom_call.1} parent=5 // pred_fallthru
        _
      %p348 = scmp.lt.s32.totalorder %s27, 2
      // Predicated region
      $region45: #{tpu_custom_call.1} parent=5 // pred_check
        %p349 = pneg %p348
      $region46: #{tpu_custom_call.1} parent=5 // pred_check_branch
        %351 = sbr.rel (%p349) target = $region48
      $region47: #{tpu_custom_call.1} parent=5 // pred_region
        // Predicated region
        $region49: #{tpu_custom_call.1} parent=47 // pred_check
          %p352 = pneg %p47
        $region50: #{tpu_custom_call.1} parent=47 // pred_check_branch
          %354 = sbr.rel (%p352) target = $region52
        $region51: #{tpu_custom_call.1} parent=47 // pred_region
          %s355 = sand.u32 %s37, 1
          %s356 = scalar_lea.sflag [#allocation3], %s355
          %s357 = sand.u32 %s37, 1
          %s358 = smul.addr %s357, 8
          %s359 = scalar_lea.vmem [#allocation2], %s358
          %s361 = ssub.s32 128, 128
          %362 = vsyncadd %s356, %s361
          %s363 = smul.addr %s27, 2
          %s364 = smul.addr %s363, 64
          %s365 = scalar_lea.hbm %s0, %s364
          %s367 = sshll.u32 %s359, 4
          %s368 = int_to_ptr.vmem [resolvable:$true] %s367
          %370 = dma.hbm_to_vmem [thread:$0]  %s365, 128, %s368, %s356
        $region52: #{tpu_custom_call.1} parent=47 // pred_fallthru
          _
        // Predicated region
        $region53: #{tpu_custom_call.1} parent=47 // pred_check
          %p371 = pneg %p73
        $region54: #{tpu_custom_call.1} parent=47 // pred_check_branch
          %373 = sbr.rel (%p371) target = $region56
        $region55: #{tpu_custom_call.1} parent=47 // pred_region
          %s374 = sand.u32 %s27, 1
          %s375 = scalar_lea.sflag [#allocation6], %s374
          %s376 = sand.u32 %s63, 1
          %s377 = smul.addr %s376, 8
          %s378 = scalar_lea.vmem [#allocation5], %s377
          %s380 = ssub.s32 128, 128
          %381 = vsyncadd %s375, %s380
          %s382 = smul.addr %s27, 128
          %s383 = scalar_lea.hbm %s1, %s382
          %s385 = sshll.u32 %s378, 4
          %s386 = int_to_ptr.vmem [resolvable:$true] %s385
          %388 = dma.hbm_to_vmem [thread:$0]  %s383, 128, %s386, %s375
        $region56: #{tpu_custom_call.1} parent=47 // pred_fallthru
          _
      $region48: #{tpu_custom_call.1} parent=5 // pred_fallthru
        _
      %p389 = scmp.le.s32.totalorder 1, %s27
      %p390 = scmp.lt.s32.totalorder %s27, 3
      %p391 = pnand %p389, %p390
      %p392 = pneg %p391
      // Predicated region
      $region57: #{tpu_custom_call.1} parent=5 // pred_check
        _
      $region58: #{tpu_custom_call.1} parent=5 // pred_check_branch
        %394 = sbr.rel (%p391) target = $region60
      $region59: #{tpu_custom_call.1} parent=5 // pred_region
        %s395 = ssub.s32 %s27, 1
        %s396 = sand.u32 %s40, 1
        %s397 = scalar_lea.sflag [#allocation3], %s396
        %s398 = sand.u32 %s40, 1
        %s399 = smul.addr %s398, 8
        %s400 = scalar_lea.vmem [#allocation2], %s399
        // Predicated region
        $region61: #{tpu_custom_call.1} parent=59 // pred_check
          %p401 = pneg %p53
        $region62: #{tpu_custom_call.1} parent=59 // pred_check_branch
          %403 = sbr.rel (%p401) target = $region64
        $region63: #{tpu_custom_call.1} parent=59 // pred_region
          %404 = dma.done %s397, 128
        $region64: #{tpu_custom_call.1} parent=59 // pred_fallthru
          _
        %s405 = sand.u32 %s32, 1
        %s406 = scalar_lea.sflag [#allocation6], %s405
        %s407 = sand.u32 %s66, 1
        %s408 = smul.addr %s407, 8
        %s409 = scalar_lea.vmem [#allocation5], %s408
        // Predicated region
        $region65: #{tpu_custom_call.1} parent=59 // pred_check
          %p410 = pneg %p79
        $region66: #{tpu_custom_call.1} parent=59 // pred_check_branch
          %412 = sbr.rel (%p410) target = $region68
        $region67: #{tpu_custom_call.1} parent=59 // pred_region
          %413 = dma.done %s406, 128
        $region68: #{tpu_custom_call.1} parent=59 // pred_fallthru
          _
        // Predicated region
        $region69: #{tpu_custom_call.1} parent=59 // pred_check
          %p414 = pneg %p121
        $region70: #{tpu_custom_call.1} parent=59 // pred_check_branch
          %416 = sbr.rel (%p414) target = $region72
        $region71: #{tpu_custom_call.1} parent=59 // pred_region
          %417 = dma.done [#allocation6], 128
        $region72: #{tpu_custom_call.1} parent=59 // pred_fallthru
          _
        // Predicated region
        $region73: #{tpu_custom_call.1} parent=59 // pred_check
          %p418 = pneg %p142
        $region74: #{tpu_custom_call.1} parent=59 // pred_check_branch
          %420 = sbr.rel (%p418) target = $region76
        $region75: #{tpu_custom_call.1} parent=59 // pred_region
          %421 = dma.done [#allocation9], 2048
        $region76: #{tpu_custom_call.1} parent=59 // pred_fallthru
          _
        // Predicated region
        $region77: #{tpu_custom_call.1} parent=59 // pred_check
          %p422 = pneg %p184
        $region78: #{tpu_custom_call.1} parent=59 // pred_check_branch
          %424 = sbr.rel (%p422) target = $region80
        $region79: #{tpu_custom_call.1} parent=59 // pred_region
          %425 = dma.done [#allocation9], 64
        $region80: #{tpu_custom_call.1} parent=59 // pred_fallthru
          _
        // Predicated region
        $region81: #{tpu_custom_call.1} parent=59 // pred_check
          %p426 = pneg %p226
        $region82: #{tpu_custom_call.1} parent=59 // pred_check_branch
          %428 = sbr.rel (%p426) target = $region84
        $region83: #{tpu_custom_call.1} parent=59 // pred_region
          %429 = dma.done [#allocation12], 512
        $region84: #{tpu_custom_call.1} parent=59 // pred_fallthru
          _
        %s430 = sand.u32 %s40, 1
        %s431 = scalar_lea.sflag [#allocation3], %s430
        %s432 = sand.u32 %s40, 1
        %s433 = smul.addr %s432, 8
        %s434 = scalar_lea.vmem [#allocation2], %s433
        %p435 = pneg %p53
        %p436 = pneg %p50
        %s437 = sand.u32 %s32, 1
        %s438 = scalar_lea.sflag [#allocation6], %s437
        %s439 = sand.u32 %s66, 1
        %s440 = smul.addr %s439, 8
        %s441 = scalar_lea.vmem [#allocation5], %s440
        %p442 = pneg %p79
        %p443 = pneg %p76
        %p444 = pneg %p100
        %p445 = pneg %p97
        %p446 = pneg %p121
        %p447 = pneg %p118
        %p448 = pneg %p142
        %p449 = pneg %p139
        %p450 = pneg %p163
        %p451 = pneg %p160
        %p452 = pneg %p184
        %p453 = pneg %p181
        %p454 = pneg %p205
        %p455 = pneg %p202
        %p456 = pneg %p226
        %p457 = pneg %p223
        %p458 = pneg %p247
        %p459 = pneg %p244
        %p460 = pneg %p273
        %p461 = pneg %p270
        %s462 = sand.u32 %s260, 1
        %s463 = scalar_lea.sflag [#allocation4], %s462
        %s464 = sand.u32 %s260, 1
        %s465 = smul.addr %s464, 16
        %s466 = scalar_lea.vmem [#allocation13], %s465
        %v467 = vld [vmem:[%s400] sm:$0xff]
        %v468 = vld [vmem:[%s409] sm:$0xff]
        %v469 = vld [vmem:[%s2] sm:$0xff]
        %v471 = vcombine.high %v467, %v467
        %vm472 = vcmask 31744
        %v474 = vsel %vm472, %v469, 0
        %vm476 = vcmask 1043456
        %v477 = vsel %vm476, %v467, 0
        %v479 = vsel %vm476, %v471, 0
        %481 = vmatprep.subr.mxu0 %v479
        %482 = vmatpush1.msra.mxu0 %v477
        %483 = vmatprep.subr.mxu0 0.0
        %484 = vmatpush1.msra.mxu0 0.0
        %485 = vmatprep.subr.mxu0 0.0
        %486 = vmatpush1.msra.mxu0 0.0
        %487 = vmatprep.subr.mxu0 0.0
        %488 = vmatpush1.msra.mxu0 0.0
        %489 = vmatprep.subr.mxu0 0.0
        %490 = vmatpush1.msra.mxu0 0.0
        %491 = vmatprep.subr.mxu0 0.0
        %492 = vmatpush1.msra.mxu0 0.0
        %493 = vmatprep.subr.mxu0 0.0
        %494 = vmatpush1.msra.mxu0 0.0
        %495 = vmatprep.subr.mxu0 0.0
        %496 = vmatpush1.msra.mxu0 0.0
        %497 = vmatprep.subr.mxu0 0.0
        %498 = vmatpush1.msra.mxu0 0.0
        %499 = vmatprep.subr.mxu0 0.0
        %500 = vmatpush1.msra.mxu0 0.0
        %501 = vmatprep.subr.mxu0 0.0
        %502 = vmatpush1.msra.mxu0 0.0
        %503 = vmatprep.subr.mxu0 0.0
        %504 = vmatpush1.msra.mxu0 0.0
        %505 = vmatprep.subr.mxu0 0.0
        %506 = vmatpush1.msra.mxu0 0.0
        %507 = vmatprep.subr.mxu0 0.0
        %508 = vmatpush1.msra.mxu0 0.0
        %509 = vmatprep.subr.mxu0 0.0
        %510 = vmatpush1.msra.mxu0 0.0
        %511 = vmatprep.subr.mxu0 0.0
        %512 = vmatpush1.msra.mxu0 0.0
        %513 = vmatprep.subr.mxu0 0.0
        %514 = vmatpush1.msra.mxu0 0.0
        %515 = vmatprep.subr.mxu0 0.0
        %516 = vmatpush1.msra.mxu0 0.0
        %517 = vmatprep.subr.mxu0 0.0
        %518 = vmatpush1.msra.mxu0 0.0
        %519 = vmatprep.subr.mxu0 0.0
        %520 = vmatpush1.msra.mxu0 0.0
        %521 = vmatprep.subr.mxu0 0.0
        %522 = vmatpush1.msra.mxu0 0.0
        %523 = vmatprep.subr.mxu0 0.0
        %524 = vmatpush1.msra.mxu0 0.0
        %525 = vmatprep.subr.mxu0 0.0
        %526 = vmatpush1.msra.mxu0 0.0
        %527 = vmatprep.subr.mxu0 0.0
        %528 = vmatpush1.msra.mxu0 0.0
        %529 = vmatprep.subr.mxu0 0.0
        %530 = vmatpush1.msra.mxu0 0.0
        %531 = vmatprep.subr.mxu0 0.0
        %532 = vmatpush1.msra.mxu0 0.0
        %533 = vmatprep.subr.mxu0 0.0
        %534 = vmatpush1.msra.mxu0 0.0
        %535 = vmatprep.subr.mxu0 0.0
        %536 = vmatpush1.msra.mxu0 0.0
        %537 = vmatprep.subr.mxu0 0.0
        %538 = vmatpush1.msra.mxu0 0.0
        %539 = vmatprep.subr.mxu0 0.0
        %540 = vmatpush1.msra.mxu0 0.0
        %541 = vmatprep.subr.mxu0 0.0
        %542 = vmatpush1.msra.mxu0 0.0
        %543 = vmatprep.subr.mxu0 0.0
        %544 = vmatpush1.msra.mxu0 0.0
        %545 = vmatprep.mubr.f32.mxu0 0.0
        %546 = vmatmul.mubr.f32.gmra.mrb[0].mxu0 %v474
        %v547 = vpop.f32.mrb[0].mxu0
        %v548 = vadd.f32 0.0, %v547
        %v549 = vpop.f32.mrb[0].mxu0
        %v550 = vadd.f32 0.0, %v549
        %551 = vdwg.mxu0
        %v552 = vld [vmem:[#allocation7] sm:$0xff]
        %vm553 = vcmask 64512
        %v555 = vsel %vm553, %v552, 0
        %557 = vmatprep.subr.mxu0 0.0
        %558 = vmatpush1.msra.mxu0 %v468
        %559 = vmatprep.subr.mxu0 0.0
        %560 = vmatpush1.msra.mxu0 0.0
        %561 = vmatprep.subr.mxu0 0.0
        %562 = vmatpush1.msra.mxu0 0.0
        %563 = vmatprep.subr.mxu0 0.0
        %564 = vmatpush1.msra.mxu0 0.0
        %565 = vmatprep.subr.mxu0 0.0
        %566 = vmatpush1.msra.mxu0 0.0
        %567 = vmatprep.subr.mxu0 0.0
        %568 = vmatpush1.msra.mxu0 0.0
        %569 = vmatprep.subr.mxu0 0.0
        %570 = vmatpush1.msra.mxu0 0.0
        %571 = vmatprep.subr.mxu0 0.0
        %572 = vmatpush1.msra.mxu0 0.0
        %573 = vmatprep.subr.mxu0 0.0
        %574 = vmatpush1.msra.mxu0 0.0
        %575 = vmatprep.subr.mxu0 0.0
        %576 = vmatpush1.msra.mxu0 0.0
        %577 = vmatprep.subr.mxu0 0.0
        %578 = vmatpush1.msra.mxu0 0.0
        %579 = vmatprep.subr.mxu0 0.0
        %580 = vmatpush1.msra.mxu0 0.0
        %581 = vmatprep.subr.mxu0 0.0
        %582 = vmatpush1.msra.mxu0 0.0
        %583 = vmatprep.subr.mxu0 0.0
        %584 = vmatpush1.msra.mxu0 0.0
        %585 = vmatprep.subr.mxu0 0.0
        %586 = vmatpush1.msra.mxu0 0.0
        %587 = vmatprep.subr.mxu0 0.0
        %588 = vmatpush1.msra.mxu0 0.0
        %589 = vmatprep.subr.mxu0 0.0
        %590 = vmatpush1.msra.mxu0 0.0
        %591 = vmatprep.subr.mxu0 0.0
        %592 = vmatpush1.msra.mxu0 0.0
        %593 = vmatprep.subr.mxu0 0.0
        %594 = vmatpush1.msra.mxu0 0.0
        %595 = vmatprep.subr.mxu0 0.0
        %596 = vmatpush1.msra.mxu0 0.0
        %597 = vmatprep.subr.mxu0 0.0
        %598 = vmatpush1.msra.mxu0 0.0
        %599 = vmatprep.subr.mxu0 0.0
        %600 = vmatpush1.msra.mxu0 0.0
        %601 = vmatprep.subr.mxu0 0.0
        %602 = vmatpush1.msra.mxu0 0.0
        %603 = vmatprep.subr.mxu0 0.0
        %604 = vmatpush1.msra.mxu0 0.0
        %605 = vmatprep.subr.mxu0 0.0
        %606 = vmatpush1.msra.mxu0 0.0
        %607 = vmatprep.subr.mxu0 0.0
        %608 = vmatpush1.msra.mxu0 0.0
        %609 = vmatprep.subr.mxu0 0.0
        %610 = vmatpush1.msra.mxu0 0.0
        %611 = vmatprep.subr.mxu0 0.0
        %612 = vmatpush1.msra.mxu0 0.0
        %613 = vmatprep.subr.mxu0 0.0
        %614 = vmatpush1.msra.mxu0 0.0
        %615 = vmatprep.subr.mxu0 0.0
        %616 = vmatpush1.msra.mxu0 0.0
        %617 = vmatprep.subr.mxu0 0.0
        %618 = vmatpush1.msra.mxu0 0.0
        %619 = vmatprep.subr.mxu0 0.0
        %620 = vmatpush1.msra.mxu0 0.0
        %621 = vmatprep.mubr.f32.mxu0 0.0
        %622 = vmatmul.mubr.f32.gmra.mrb[0].mxu0 %v555
        %v623 = vpop.f32.mrb[0].mxu0
        %v624 = vadd.f32 0.0, %v623
        %v625 = vpop.f32.mrb[0].mxu0
        %626 = vdwg.mxu0
        %v627 = vld [vmem:[#allocation8] sm:$0xff]
        %v628 = vld [vmem:[#allocation8 + $0x8] sm:$0xff]
        %v629 = vld [vmem:[#allocation8 + $0x10] sm:$0xff]
        %v630 = vld [vmem:[#allocation8 + $0x18] sm:$0xff]
        %v631 = vld [vmem:[#allocation8 + $0x20] sm:$0xff]
        %v632 = vld [vmem:[#allocation8 + $0x28] sm:$0xff]
        %v633 = vld [vmem:[#allocation8 + $0x30] sm:$0xff]
        %v634 = vld [vmem:[#allocation8 + $0x38] sm:$0xff]
        %v635 = vld [vmem:[#allocation8 + $0x40] sm:$0xff]
        %v636 = vld [vmem:[#allocation8 + $0x48] sm:$0xff]
        %v637 = vld [vmem:[#allocation8 + $0x50] sm:$0xff]
        %v638 = vld [vmem:[#allocation8 + $0x58] sm:$0xff]
        %v639 = vld [vmem:[#allocation8 + $0x60] sm:$0xff]
        %v640 = vld [vmem:[#allocation8 + $0x68] sm:$0xff]
        %v641 = vld [vmem:[#allocation8 + $0x70] sm:$0xff]
        %v642 = vld [vmem:[#allocation8 + $0x78] sm:$0xff]
        %vm643 = vcmask 523264
        %v645 = vsel %vm643, %v624, 0
        %647 = vmatprep.subr.mxu0 %v628
        %648 = vmatpush1.msra.mxu0 %v627
        %649 = vmatprep.subr.mxu0 %v630
        %650 = vmatpush1.msra.mxu0 %v629
        %651 = vmatprep.subr.mxu0 %v632
        %652 = vmatpush1.msra.mxu0 %v631
        %653 = vmatprep.subr.mxu0 %v634
        %654 = vmatpush1.msra.mxu0 %v633
        %655 = vmatprep.subr.mxu0 %v636
        %656 = vmatpush1.msra.mxu0 %v635
        %657 = vmatprep.subr.mxu0 %v638
        %658 = vmatpush1.msra.mxu0 %v637
        %659 = vmatprep.subr.mxu0 %v640
        %660 = vmatpush1.msra.mxu0 %v639
        %661 = vmatprep.subr.mxu0 %v642
        %662 = vmatpush1.msra.mxu0 %v641
        %663 = vmatprep.subr.mxu0 0.0
        %664 = vmatpush1.msra.mxu0 0.0
        %665 = vmatprep.subr.mxu0 0.0
        %666 = vmatpush1.msra.mxu0 0.0
        %667 = vmatprep.subr.mxu0 0.0
        %668 = vmatpush1.msra.mxu0 0.0
        %669 = vmatprep.subr.mxu0 0.0
        %670 = vmatpush1.msra.mxu0 0.0
        %671 = vmatprep.subr.mxu0 0.0
        %672 = vmatpush1.msra.mxu0 0.0
        %673 = vmatprep.subr.mxu0 0.0
        %674 = vmatpush1.msra.mxu0 0.0
        %675 = vmatprep.subr.mxu0 0.0
        %676 = vmatpush1.msra.mxu0 0.0
        %677 = vmatprep.subr.mxu0 0.0
        %678 = vmatpush1.msra.mxu0 0.0
        %679 = vmatprep.subr.mxu0 0.0
        %680 = vmatpush1.msra.mxu0 0.0
        %681 = vmatprep.subr.mxu0 0.0
        %682 = vmatpush1.msra.mxu0 0.0
        %683 = vmatprep.subr.mxu0 0.0
        %684 = vmatpush1.msra.mxu0 0.0
        %685 = vmatprep.subr.mxu0 0.0
        %686 = vmatpush1.msra.mxu0 0.0
        %687 = vmatprep.subr.mxu0 0.0
        %688 = vmatpush1.msra.mxu0 0.0
        %689 = vmatprep.subr.mxu0 0.0
        %690 = vmatpush1.msra.mxu0 0.0
        %691 = vmatprep.subr.mxu0 0.0
        %692 = vmatpush1.msra.mxu0 0.0
        %693 = vmatprep.subr.mxu0 0.0
        %694 = vmatpush1.msra.mxu0 0.0
        %695 = vmatprep.subr.mxu0 0.0
        %696 = vmatpush1.msra.mxu0 0.0
        %697 = vmatprep.subr.mxu0 0.0
        %698 = vmatpush1.msra.mxu0 0.0
        %699 = vmatprep.subr.mxu0 0.0
        %700 = vmatpush1.msra.mxu0 0.0
        %701 = vmatprep.subr.mxu0 0.0
        %702 = vmatpush1.msra.mxu0 0.0
        %703 = vmatprep.subr.mxu0 0.0
        %704 = vmatpush1.msra.mxu0 0.0
        %705 = vmatprep.subr.mxu0 0.0
        %706 = vmatpush1.msra.mxu0 0.0
        %707 = vmatprep.subr.mxu0 0.0
        %708 = vmatpush1.msra.mxu0 0.0
        %709 = vmatprep.subr.mxu0 0.0
        %710 = vmatpush1.msra.mxu0 0.0
        %711 = vmatprep.mubr.f32.mxu0 0.0
        %712 = vmatmul.mubr.f32.gmra.mrb[0].mxu0 %v645
        %v713 = vpop.f32.mrb[0].mxu0
        %v714 = vadd.f32 0.0, %v713
        %v715 = vpop.f32.mrb[0].mxu0
        %v716 = vadd.f32 0.0, %v715
        %717 = vdwg.mxu0
        %v718 = vlaneseq
        %v719 = vand.u32 %v718, 127
        %720 = vrot.lane.b32.xlu0 %v719, 1
        %v721 = vpop.permute.xlu0 %720
        %vm722 = vcmp.eq.s32.totalorder %v721, 127
        %v723 = vld [vmem:[%s7] sm:$0xff]
        %v724 = vld [vmem:[%s7 + $0x8] sm:$0xff]
        %v725 = vld [vmem:[%s7 + $0x10] sm:$0x1]
        %v726 = vld [vmem:[%s7 + $0x18] sm:$0x1]
        %v727 = vld [vmem:[#allocation11] sm:$0xff]
        %v728 = vld [vmem:[#allocation11 + $0x8] sm:$0xff]
        %v729 = vld [vmem:[#allocation11 + $0x10] sm:$0x1]
        %v730 = vld [vmem:[#allocation11 + $0x18] sm:$0x1]
        %v731 = vsel %vm722, 1, 0
        %s732 = vtos %v731
        %v733 = vstv %s732
        %vm734 = vcmp.eq.s32.totalorder %v733, 1
        %v735 = vsel %vm734, %v723, %v727
        %v736 = vsel %vm734, %v724, %v728
        %v737 = vsel %vm734, %v725, %v729
        %v738 = vsel %vm734, %v726, %v730
        %v739 = vld [vmem:[%s5] sm:$0xf]
        %v740 = vld [vmem:[#allocation10] sm:$0xf]
        %v741 = vsel %vm734, %v739, %v740
        %742 = vrot.lane.b32.xlu0 %v714, 17
        %v743 = vpop.permute.xlu0 %742
        %744 = vrot.lane.b32.xlu0 %v548, 17
        %v745 = vpop.permute.xlu0 %744
        %746 = vrot.lane.b32.xlu0 %v716, 17
        %v747 = vpop.permute.xlu0 %746
        %748 = vrot.lane.b32.xlu0 %v550, 17
        %v749 = vpop.permute.xlu0 %748
        %vm750 = vcmp.lt.s32.totalorder %v719, 17
        %v751 = vsel %vm750, %v743, %v747
        %v752 = vsel %vm750, %v745, %v749
        %v753 = vsel %vm750, %v747, %v743
        %v754 = vsel %vm750, %v749, %v745
        %v755 = vlaneseq
        %v756 = vshrl.u32 %v755, 7
        %v757 = vsub.s32 0, %v756
        %v758 = vrot.slane %v735, %v757
        %v759 = vlaneseq
        %v760 = vshrl.u32 %v759, 7
        %v761 = vsub.s32 0, %v760
        %v762 = vrot.slane %v736, %v761
        %v763 = vmul.f32 %v753, %v758
        %v764 = vmul.f32 %v751, %v762
        %v765 = vmul.f32 %v754, %v758
        %v766 = vmul.f32 %v752, %v762
        %767 = vrot.lane.b32.xlu0 %v714, 16
        %v768 = vpop.permute.xlu0 %767
        %769 = vrot.lane.b32.xlu0 %v548, 16
        %v770 = vpop.permute.xlu0 %769
        %771 = vrot.lane.b32.xlu0 %v716, 16
        %v772 = vpop.permute.xlu0 %771
        %773 = vrot.lane.b32.xlu0 %v550, 16
        %v774 = vpop.permute.xlu0 %773
        %vm775 = vcmp.lt.s32.totalorder %v719, 16
        %v776 = vsel %vm775, %v768, %v772
        %v777 = vsel %vm775, %v770, %v774
        %v778 = vsel %vm775, %v772, %v768
        %v779 = vsel %vm775, %v774, %v770
        %v780 = vlaneseq
        %v781 = vshrl.u32 %v780, 7
        %v782 = vsub.s32 1, %v781
        %v783 = vrot.slane %v735, %v782
        %v784 = vlaneseq
        %v785 = vshrl.u32 %v784, 7
        %v786 = vsub.s32 1, %v785
        %v787 = vrot.slane %v736, %v786
        %v788 = vmul.f32 %v778, %v783
        %v789 = vmul.f32 %v776, %v787
        %v790 = vmul.f32 %v779, %v783
        %v791 = vmul.f32 %v777, %v787
        %792 = vrot.lane.b32.xlu0 %v714, 15
        %v793 = vpop.permute.xlu0 %792
        %794 = vrot.lane.b32.xlu0 %v548, 15
        %v795 = vpop.permute.xlu0 %794
        %796 = vrot.lane.b32.xlu0 %v716, 15
        %v797 = vpop.permute.xlu0 %796
        %798 = vrot.lane.b32.xlu0 %v550, 15
        %v799 = vpop.permute.xlu0 %798
        %vm800 = vcmp.lt.s32.totalorder %v719, 15
        %v801 = vsel %vm800, %v793, %v797
        %v802 = vsel %vm800, %v795, %v799
        %v803 = vsel %vm800, %v797, %v793
        %v804 = vsel %vm800, %v799, %v795
        %v805 = vlaneseq
        %v806 = vshrl.u32 %v805, 7
        %v807 = vsub.s32 2, %v806
        %v808 = vrot.slane %v735, %v807
        %v809 = vlaneseq
        %v810 = vshrl.u32 %v809, 7
        %v811 = vsub.s32 2, %v810
        %v812 = vrot.slane %v736, %v811
        %v813 = vmul.f32 %v803, %v808
        %v814 = vmul.f32 %v801, %v812
        %v815 = vmul.f32 %v804, %v808
        %v816 = vmul.f32 %v802, %v812
        %817 = vrot.lane.b32.xlu0 %v714, 1
        %v818 = vpop.permute.xlu0 %817
        %819 = vrot.lane.b32.xlu0 %v548, 1
        %v820 = vpop.permute.xlu0 %819
        %821 = vrot.lane.b32.xlu0 %v716, 1
        %v822 = vpop.permute.xlu0 %821
        %823 = vrot.lane.b32.xlu0 %v550, 1
        %v824 = vpop.permute.xlu0 %823
        %vm825 = vcmp.lt.s32.totalorder %v719, 1
        %v826 = vsel %vm825, %v818, %v822
        %v827 = vsel %vm825, %v820, %v824
        %v828 = vsel %vm825, %v822, %v818
        %v829 = vsel %vm825, %v824, %v820
        %v830 = vlaneseq
        %v831 = vshrl.u32 %v830, 7
        %v832 = vsub.s32 3, %v831
        %v833 = vrot.slane %v735, %v832
        %v834 = vlaneseq
        %v835 = vshrl.u32 %v834, 7
        %v836 = vsub.s32 3, %v835
        %v837 = vrot.slane %v736, %v836
        %v838 = vmul.f32 %v828, %v833
        %v839 = vmul.f32 %v826, %v837
        %v840 = vmul.f32 %v829, %v833
        %v841 = vmul.f32 %v827, %v837
        %v842 = vlaneseq
        %v843 = vshrl.u32 %v842, 7
        %v844 = vsub.s32 4, %v843
        %v845 = vrot.slane %v735, %v844
        %v846 = vlaneseq
        %v847 = vshrl.u32 %v846, 7
        %v848 = vsub.s32 4, %v847
        %v849 = vrot.slane %v736, %v848
        %v850 = vmul.f32 %v714, %v845
        %v851 = vmul.f32 %v716, %v849
        %v852 = vmul.f32 %v548, %v845
        %v853 = vmul.f32 %v550, %v849
        %854 = vrot.lane.b32.xlu0 %v714, 127
        %v855 = vpop.permute.xlu0 %854
        %856 = vrot.lane.b32.xlu0 %v548, 127
        %v857 = vpop.permute.xlu0 %856
        %858 = vrot.lane.b32.xlu0 %v716, 127
        %v859 = vpop.permute.xlu0 %858
        %860 = vrot.lane.b32.xlu0 %v550, 127
        %v861 = vpop.permute.xlu0 %860
        %vm862 = vcmp.lt.s32.totalorder %v719, 127
        %v863 = vsel %vm862, %v855, %v859
        %v864 = vsel %vm862, %v857, %v861
        %v865 = vsel %vm862, %v859, %v855
        %v866 = vsel %vm862, %v861, %v857
        %v867 = vlaneseq
        %v868 = vshrl.u32 %v867, 7
        %v869 = vsub.s32 5, %v868
        %v870 = vrot.slane %v735, %v869
        %v871 = vlaneseq
        %v872 = vshrl.u32 %v871, 7
        %v873 = vsub.s32 5, %v872
        %v874 = vrot.slane %v736, %v873
        %v875 = vmul.f32 %v863, %v870
        %v876 = vmul.f32 %v865, %v874
        %v877 = vmul.f32 %v864, %v870
        %v878 = vmul.f32 %v866, %v874
        %879 = vrot.lane.b32.xlu0 %v714, 113
        %v880 = vpop.permute.xlu0 %879
        %881 = vrot.lane.b32.xlu0 %v548, 113
        %v882 = vpop.permute.xlu0 %881
        %883 = vrot.lane.b32.xlu0 %v716, 113
        %v884 = vpop.permute.xlu0 %883
        %885 = vrot.lane.b32.xlu0 %v550, 113
        %v886 = vpop.permute.xlu0 %885
        %vm887 = vcmp.lt.s32.totalorder %v719, 113
        %v888 = vsel %vm887, %v880, %v884
        %v889 = vsel %vm887, %v882, %v886
        %v890 = vsel %vm887, %v884, %v880
        %v891 = vsel %vm887, %v886, %v882
        %v892 = vlaneseq
        %v893 = vshrl.u32 %v892, 7
        %v894 = vsub.s32 6, %v893
        %v895 = vrot.slane %v735, %v894
        %v896 = vlaneseq
        %v897 = vshrl.u32 %v896, 7
        %v898 = vsub.s32 6, %v897
        %v899 = vrot.slane %v736, %v898
        %v900 = vmul.f32 %v888, %v895
        %v901 = vmul.f32 %v890, %v899
        %v902 = vmul.f32 %v889, %v895
        %v903 = vmul.f32 %v891, %v899
        %904 = vrot.lane.b32.xlu0 %v714, 112
        %v905 = vpop.permute.xlu0 %904
        %906 = vrot.lane.b32.xlu0 %v548, 112
        %v907 = vpop.permute.xlu0 %906
        %908 = vrot.lane.b32.xlu0 %v716, 112
        %v909 = vpop.permute.xlu0 %908
        %910 = vrot.lane.b32.xlu0 %v550, 112
        %v911 = vpop.permute.xlu0 %910
        %vm912 = vcmp.lt.s32.totalorder %v719, 112
        %v913 = vsel %vm912, %v905, %v909
        %v914 = vsel %vm912, %v907, %v911
        %v915 = vsel %vm912, %v909, %v905
        %v916 = vsel %vm912, %v911, %v907
        %v917 = vlaneseq
        %v918 = vshrl.u32 %v917, 7
        %v919 = vsub.s32 7, %v918
        %v920 = vrot.slane %v735, %v919
        %v921 = vlaneseq
        %v922 = vshrl.u32 %v921, 7
        %v923 = vsub.s32 7, %v922
        %v924 = vrot.slane %v736, %v923
        %v925 = vmul.f32 %v913, %v920
        %v926 = vmul.f32 %v915, %v924
        %v927 = vmul.f32 %v914, %v920
        %v928 = vmul.f32 %v916, %v924
        %929 = vrot.lane.b32.xlu0 %v714, 111
        %v930 = vpop.permute.xlu0 %929
        %931 = vrot.lane.b32.xlu0 %v548, 111
        %v932 = vpop.permute.xlu0 %931
        %933 = vrot.lane.b32.xlu0 %v716, 111
        %v934 = vpop.permute.xlu0 %933
        %935 = vrot.lane.b32.xlu0 %v550, 111
        %v936 = vpop.permute.xlu0 %935
        %vm937 = vcmp.lt.s32.totalorder %v719, 111
        %v938 = vsel %vm937, %v930, %v934
        %v939 = vsel %vm937, %v932, %v936
        %v940 = vsel %vm937, %v934, %v930
        %v941 = vsel %vm937, %v936, %v932
        %v942 = vlaneseq
        %v943 = vshrl.u32 %v942, 7
        %v944 = vsub.s32 0, %v943
        %v945 = vrot.slane %v737, %v944
        %v946 = vlaneseq
        %v947 = vshrl.u32 %v946, 7
        %v948 = vsub.s32 0, %v947
        %v949 = vrot.slane %v738, %v948
        %v950 = vmul.f32 %v938, %v945
        %v951 = vmul.f32 %v940, %v949
        %v952 = vmul.f32 %v939, %v945
        %v953 = vmul.f32 %v941, %v949
        %v956 = vunpack.c.l.s4 1983009808
        %v957 = vunpack.c.0.s8 %v956
        %v958 = vlaneseq
        %v959 = vshrl.u32 %v958, 7
        %v960 = vsub.s32 %v957, %v959
        %v961 = vrot.slane %v741, %v960
        %v962 = vcombine.high %v961, %v961
        %vm964 = vcmask 130048
        %v965 = vsel %vm964, %v962, 0
        %967 = vmatprep.subr.mxu0 %v764
        %968 = vmatpush1.msra.mxu0 %v763
        %969 = vmatprep.subr.mxu0 %v766
        %970 = vmatpush1.msra.mxu0 %v765
        %971 = vmatprep.subr.mxu0 %v789
        %972 = vmatpush1.msra.mxu0 %v788
        %973 = vmatprep.subr.mxu0 %v791
        %974 = vmatpush1.msra.mxu0 %v790
        %975 = vmatprep.subr.mxu0 %v814
        %976 = vmatpush1.msra.mxu0 %v813
        %977 = vmatprep.subr.mxu0 %v816
        %978 = vmatpush1.msra.mxu0 %v815
        %979 = vmatprep.subr.mxu0 %v839
        %980 = vmatpush1.msra.mxu0 %v838
        %981 = vmatprep.subr.mxu0 %v841
        %982 = vmatpush1.msra.mxu0 %v840
        %983 = vmatprep.subr.mxu0 %v851
        %984 = vmatpush1.msra.mxu0 %v850
        %985 = vmatprep.subr.mxu0 %v853
        %986 = vmatpush1.msra.mxu0 %v852
        %987 = vmatprep.subr.mxu0 %v876
        %988 = vmatpush1.msra.mxu0 %v875
        %989 = vmatprep.subr.mxu0 %v878
        %990 = vmatpush1.msra.mxu0 %v877
        %991 = vmatprep.subr.mxu0 %v901
        %992 = vmatpush1.msra.mxu0 %v900
        %993 = vmatprep.subr.mxu0 %v903
        %994 = vmatpush1.msra.mxu0 %v902
        %995 = vmatprep.subr.mxu0 %v926
        %996 = vmatpush1.msra.mxu0 %v925
        %997 = vmatprep.subr.mxu0 %v928
        %998 = vmatpush1.msra.mxu0 %v927
        %999 = vmatprep.subr.mxu0 %v951
        %1000 = vmatpush1.msra.mxu0 %v950
        %1001 = vmatprep.subr.mxu0 %v953
        %1002 = vmatpush1.msra.mxu0 %v952
        %1003 = vmatprep.subr.mxu0 0.0
        %1004 = vmatpush1.msra.mxu0 0.0
        %1005 = vmatprep.subr.mxu0 0.0
        %1006 = vmatpush1.msra.mxu0 0.0
        %1007 = vmatprep.subr.mxu0 0.0
        %1008 = vmatpush1.msra.mxu0 0.0
        %1009 = vmatprep.subr.mxu0 0.0
        %1010 = vmatpush1.msra.mxu0 0.0
        %1011 = vmatprep.subr.mxu0 0.0
        %1012 = vmatpush1.msra.mxu0 0.0
        %1013 = vmatprep.subr.mxu0 0.0
        %1014 = vmatpush1.msra.mxu0 0.0
        %1015 = vmatprep.subr.mxu0 0.0
        %1016 = vmatpush1.msra.mxu0 0.0
        %1017 = vmatprep.subr.mxu0 0.0
        %1018 = vmatpush1.msra.mxu0 0.0
        %1019 = vmatprep.subr.mxu0 0.0
        %1020 = vmatpush1.msra.mxu0 0.0
        %1021 = vmatprep.subr.mxu0 0.0
        %1022 = vmatpush1.msra.mxu0 0.0
        %1023 = vmatprep.subr.mxu0 0.0
        %1024 = vmatpush1.msra.mxu0 0.0
        %1025 = vmatprep.subr.mxu0 0.0
        %1026 = vmatpush1.msra.mxu0 0.0
        %1027 = vmatprep.subr.mxu0 0.0
        %1028 = vmatpush1.msra.mxu0 0.0
        %1029 = vmatprep.subr.mxu0 0.0
        %1030 = vmatpush1.msra.mxu0 0.0
        %1031 = vmatprep.mubr.f32.mxu0 %v965
        %1032 = vmatmul.mubr.f32.gmra.mrb[0].mxu0 %v961
        %v1033 = vpop.f32.mrb[0].mxu0
        %v1034 = vadd.f32 0.0, %v1033
        %v1035 = vpop.f32.mrb[0].mxu0
        %v1036 = vadd.f32 0.0, %v1035
        %1037 = vdwg.mxu0
        %v1038 = vld [vmem:[%s9] sm:$0xf]
        %v1039 = vmul.f32 %v1034, 0.0625
        %v1040 = vmul.f32 %v1036, 0.0625
        %v1043 = vcombine.low %v1039, %v1040
        %v1045 = vunpack.c.l.s4 1983009808
        %v1046 = vunpack.c.0.s8 %v1045
        %v1047 = vlaneseq
        %v1048 = vshrl.u32 %v1047, 7
        %v1049 = vsub.s32 %v1046, %v1048
        %v1050 = vrot.slane %v1043, %v1049
        %v1052 = vadd.f32 %v1038, %v1050
        %v1053 = vadd.f32 %v1052, 1.0
        %v1054 = vmul.f32 %v1053, 8.0
        %v1055 = vsub.f32 %v1054, 0.5
        %v1056 = vfloor.f32 %v1055
        %v1057 = vsub.f32 %v1055, %v1056
        %v1058 = vsub.f32 1.0, %v1057
        %v1059 = vcvt.f32.s32.to.zero.pseudo %v1056
        %v1060 = vadd.s32 %v1059, 1
        %v1061 = vlaneseq
        %v1062 = vshrl.u32 %v1061, 7
        %v1063 = vadd.s32 %v1062, 8
        %v1064 = vadd.s32 %v1062, 16
        %v1065 = vadd.s32 %v1062, 24
        %v1066 = vadd.s32 %v1062, 32
        %v1067 = vadd.s32 %v1062, 40
        %v1068 = vadd.s32 %v1062, 48
        %v1069 = vadd.s32 %v1062, 56
        %v1070 = vadd.s32 %v1062, 64
        %v1071 = vadd.s32 %v1062, 72
        %v1072 = vadd.s32 %v1062, 80
        %v1073 = vadd.s32 %v1062, 88
        %v1074 = vadd.s32 %v1062, 96
        %v1075 = vadd.s32 %v1062, 104
        %v1076 = vadd.s32 %v1062, 112
        %v1077 = vadd.s32 %v1062, 120
        %v1078 = vadd.s32 %v1062, 128
        %v1079 = vadd.s32 %v1062, 136
        %v1080 = vadd.s32 %v1062, 144
        %v1081 = vadd.s32 %v1062, 152
        %v1082 = vadd.s32 %v1062, 160
        %v1083 = vadd.s32 %v1062, 168
        %v1084 = vadd.s32 %v1062, 176
        %v1085 = vadd.s32 %v1062, 184
        %v1086 = vadd.s32 %v1062, 192
        %v1087 = vadd.s32 %v1062, 200
        %v1088 = vadd.s32 %v1062, 208
        %v1089 = vadd.s32 %v1062, 216
        %v1090 = vadd.s32 %v1062, 224
        %v1091 = vadd.s32 %v1062, 232
        %v1092 = vadd.s32 %v1062, 240
        %v1093 = vadd.s32 %v1062, 248
        %v1095 = vrot.slane %v1058, 7
        %v1097 = vmul.f32 %v1058, %v1095
        %vm1098 = vcmp.ge.s32.totalorder %v1059, 0
        %vm1099 = vcmp.lt.s32.totalorder %v1059, 16
        %vm1100 = vmand %vm1098, %vm1099
        %v1101 = vsel %vm1098, 1, 0
        %v1102 = vrot.slane %v1101, 7
        %v1103 = vrot.slane %v1102, 2
        %vm1104 = vcmp.ne.s32.totalorder %v1103, 0
        %vm1105 = vmand %vm1100, %vm1104
        %v1106 = vsel %vm1099, 1, 0
        %v1107 = vrot.slane %v1106, 7
        %v1108 = vrot.slane %v1107, 2
        %vm1109 = vcmp.ne.s32.totalorder %v1108, 0
        %vm1110 = vmand %vm1105, %vm1109
        %v1111 = vmul.u32 %v1059, 16
        %v1112 = vrot.slane %v1059, 7
        %v1113 = vadd.s32 %v1111, %v1112
        %v1114 = vlaneseq
        %v1115 = vshrl.u32 %v1114, 7
        %v1116 = vsub.s32 1, %v1115
        %v1117 = vrot.slane %v1113, %v1116
        %v1118 = vlaneseq
        %v1119 = vshrl.u32 %v1118, 7
        %v1120 = vsub.s32 3, %v1119
        %v1121 = vrot.slane %v1113, %v1120
        %v1122 = vlaneseq
        %v1123 = vshrl.u32 %v1122, 7
        %v1124 = vsub.s32 1, %v1123
        %v1125 = vrot.slane %v1117, %v1124
        %v1126 = vlaneseq
        %v1127 = vshrl.u32 %v1126, 7
        %v1128 = vsub.s32 1, %v1127
        %v1129 = vrot.slane %v1121, %v1128
        %vm1130 = vcmp.eq.s32.totalorder %v1062, %v1125
        %vm1131 = vcmp.eq.s32.totalorder %v1062, %v1129
        %vm1132 = vcmp.eq.s32.totalorder %v1063, %v1125
        %vm1133 = vcmp.eq.s32.totalorder %v1063, %v1129
        %vm1134 = vcmp.eq.s32.totalorder %v1064, %v1125
        %vm1135 = vcmp.eq.s32.totalorder %v1064, %v1129
        %vm1136 = vcmp.eq.s32.totalorder %v1065, %v1125
        %vm1137 = vcmp.eq.s32.totalorder %v1065, %v1129
        %vm1138 = vcmp.eq.s32.totalorder %v1066, %v1125
        %vm1139 = vcmp.eq.s32.totalorder %v1066, %v1129
        %vm1140 = vcmp.eq.s32.totalorder %v1067, %v1125
        %vm1141 = vcmp.eq.s32.totalorder %v1067, %v1129
        %vm1142 = vcmp.eq.s32.totalorder %v1068, %v1125
        %vm1143 = vcmp.eq.s32.totalorder %v1068, %v1129
        %vm1144 = vcmp.eq.s32.totalorder %v1069, %v1125
        %vm1145 = vcmp.eq.s32.totalorder %v1069, %v1129
        %vm1146 = vcmp.eq.s32.totalorder %v1070, %v1125
        %vm1147 = vcmp.eq.s32.totalorder %v1070, %v1129
        %vm1148 = vcmp.eq.s32.totalorder %v1071, %v1125
        %vm1149 = vcmp.eq.s32.totalorder %v1071, %v1129
        %vm1150 = vcmp.eq.s32.totalorder %v1072, %v1125
        %vm1151 = vcmp.eq.s32.totalorder %v1072, %v1129
        %vm1152 = vcmp.eq.s32.totalorder %v1073, %v1125
        %vm1153 = vcmp.eq.s32.totalorder %v1073, %v1129
        %vm1154 = vcmp.eq.s32.totalorder %v1074, %v1125
        %vm1155 = vcmp.eq.s32.totalorder %v1074, %v1129
        %vm1156 = vcmp.eq.s32.totalorder %v1075, %v1125
        %vm1157 = vcmp.eq.s32.totalorder %v1075, %v1129
        %vm1158 = vcmp.eq.s32.totalorder %v1076, %v1125
        %vm1159 = vcmp.eq.s32.totalorder %v1076, %v1129
        %vm1160 = vcmp.eq.s32.totalorder %v1077, %v1125
        %vm1161 = vcmp.eq.s32.totalorder %v1077, %v1129
        %vm1162 = vcmp.eq.s32.totalorder %v1078, %v1125
        %vm1163 = vcmp.eq.s32.totalorder %v1078, %v1129
        %vm1164 = vcmp.eq.s32.totalorder %v1079, %v1125
        %vm1165 = vcmp.eq.s32.totalorder %v1079, %v1129
        %vm1166 = vcmp.eq.s32.totalorder %v1080, %v1125
        %vm1167 = vcmp.eq.s32.totalorder %v1080, %v1129
        %vm1168 = vcmp.eq.s32.totalorder %v1081, %v1125
        %vm1169 = vcmp.eq.s32.totalorder %v1081, %v1129
        %vm1170 = vcmp.eq.s32.totalorder %v1082, %v1125
        %vm1171 = vcmp.eq.s32.totalorder %v1082, %v1129
        %vm1172 = vcmp.eq.s32.totalorder %v1083, %v1125
        %vm1173 = vcmp.eq.s32.totalorder %v1083, %v1129
        %vm1174 = vcmp.eq.s32.totalorder %v1084, %v1125
        %vm1175 = vcmp.eq.s32.totalorder %v1084, %v1129
        %vm1176 = vcmp.eq.s32.totalorder %v1085, %v1125
        %vm1177 = vcmp.eq.s32.totalorder %v1085, %v1129
        %vm1178 = vcmp.eq.s32.totalorder %v1086, %v1125
        %vm1179 = vcmp.eq.s32.totalorder %v1086, %v1129
        %vm1180 = vcmp.eq.s32.totalorder %v1087, %v1125
        %vm1181 = vcmp.eq.s32.totalorder %v1087, %v1129
        %vm1182 = vcmp.eq.s32.totalorder %v1088, %v1125
        %vm1183 = vcmp.eq.s32.totalorder %v1088, %v1129
        %vm1184 = vcmp.eq.s32.totalorder %v1089, %v1125
        %vm1185 = vcmp.eq.s32.totalorder %v1089, %v1129
        %vm1186 = vcmp.eq.s32.totalorder %v1090, %v1125
        %vm1187 = vcmp.eq.s32.totalorder %v1090, %v1129
        %vm1188 = vcmp.eq.s32.totalorder %v1091, %v1125
        %vm1189 = vcmp.eq.s32.totalorder %v1091, %v1129
        %vm1190 = vcmp.eq.s32.totalorder %v1092, %v1125
        %vm1191 = vcmp.eq.s32.totalorder %v1092, %v1129
        %vm1192 = vcmp.eq.s32.totalorder %v1093, %v1125
        %vm1193 = vcmp.eq.s32.totalorder %v1093, %v1129
        %v1194 = vsel %vm1110, 1, 0
        %v1195 = vlaneseq
        %v1196 = vshrl.u32 %v1195, 7
        %v1197 = vsub.s32 0, %v1196
        %v1198 = vrot.slane %v1194, %v1197
        %v1199 = vlaneseq
        %v1200 = vshrl.u32 %v1199, 7
        %v1201 = vsub.s32 2, %v1200
        %v1202 = vrot.slane %v1194, %v1201
        %v1203 = vlaneseq
        %v1204 = vshrl.u32 %v1203, 7
        %v1205 = vsub.s32 0, %v1204
        %v1206 = vrot.slane %v1198, %v1205
        %v1207 = vlaneseq
        %v1208 = vshrl.u32 %v1207, 7
        %v1209 = vsub.s32 0, %v1208
        %v1210 = vrot.slane %v1202, %v1209
        %vm1211 = vcmp.eq.s32.totalorder %v1206, 1
        %vm1212 = vcmp.eq.s32.totalorder %v1210, 1
        %vm1213 = vmand %vm1130, %vm1211
        %vm1214 = vmand %vm1131, %vm1212
        %vm1215 = vmand %vm1132, %vm1211
        %vm1216 = vmand %vm1133, %vm1212
        %vm1217 = vmand %vm1134, %vm1211
        %vm1218 = vmand %vm1135, %vm1212
        %vm1219 = vmand %vm1136, %vm1211
        %vm1220 = vmand %vm1137, %vm1212
        %vm1221 = vmand %vm1138, %vm1211
        %vm1222 = vmand %vm1139, %vm1212
        %vm1223 = vmand %vm1140, %vm1211
        %vm1224 = vmand %vm1141, %vm1212
        %vm1225 = vmand %vm1142, %vm1211
        %vm1226 = vmand %vm1143, %vm1212
        %vm1227 = vmand %vm1144, %vm1211
        %vm1228 = vmand %vm1145, %vm1212
        %vm1229 = vmand %vm1146, %vm1211
        %vm1230 = vmand %vm1147, %vm1212
        %vm1231 = vmand %vm1148, %vm1211
        %vm1232 = vmand %vm1149, %vm1212
        %vm1233 = vmand %vm1150, %vm1211
        %vm1234 = vmand %vm1151, %vm1212
        %vm1235 = vmand %vm1152, %vm1211
        %vm1236 = vmand %vm1153, %vm1212
        %vm1237 = vmand %vm1154, %vm1211
        %vm1238 = vmand %vm1155, %vm1212
        %vm1239 = vmand %vm1156, %vm1211
        %vm1240 = vmand %vm1157, %vm1212
        %vm1241 = vmand %vm1158, %vm1211
        %vm1242 = vmand %vm1159, %vm1212
        %vm1243 = vmand %vm1160, %vm1211
        %vm1244 = vmand %vm1161, %vm1212
        %vm1245 = vmand %vm1162, %vm1211
        %vm1246 = vmand %vm1163, %vm1212
        %vm1247 = vmand %vm1164, %vm1211
        %vm1248 = vmand %vm1165, %vm1212
        %vm1249 = vmand %vm1166, %vm1211
        %vm1250 = vmand %vm1167, %vm1212
        %vm1251 = vmand %vm1168, %vm1211
        %vm1252 = vmand %vm1169, %vm1212
        %vm1253 = vmand %vm1170, %vm1211
        %vm1254 = vmand %vm1171, %vm1212
        %vm1255 = vmand %vm1172, %vm1211
        %vm1256 = vmand %vm1173, %vm1212
        %vm1257 = vmand %vm1174, %vm1211
        %vm1258 = vmand %vm1175, %vm1212
        %vm1259 = vmand %vm1176, %vm1211
        %vm1260 = vmand %vm1177, %vm1212
        %vm1261 = vmand %vm1178, %vm1211
        %vm1262 = vmand %vm1179, %vm1212
        %vm1263 = vmand %vm1180, %vm1211
        %vm1264 = vmand %vm1181, %vm1212
        %vm1265 = vmand %vm1182, %vm1211
        %vm1266 = vmand %vm1183, %vm1212
        %vm1267 = vmand %vm1184, %vm1211
        %vm1268 = vmand %vm1185, %vm1212
        %vm1269 = vmand %vm1186, %vm1211
        %vm1270 = vmand %vm1187, %vm1212
        %vm1271 = vmand %vm1188, %vm1211
        %vm1272 = vmand %vm1189, %vm1212
        %vm1273 = vmand %vm1190, %vm1211
        %vm1274 = vmand %vm1191, %vm1212
        %vm1275 = vmand %vm1192, %vm1211
        %vm1276 = vmand %vm1193, %vm1212
        %v1278 = vlaneseq
        %v1279 = vshrl.u32 %v1278, 7
        %v1280 = vsub.s32 1, %v1279
        %v1281 = vrot.slane %v1097, %v1280
        %v1282 = vlaneseq
        %v1283 = vshrl.u32 %v1282, 7
        %v1284 = vsub.s32 3, %v1283
        %v1285 = vrot.slane %v1097, %v1284
        %v1288 = vlaneseq
        %v1289 = vshrl.u32 %v1288, 7
        %v1290 = vsub.s32 1, %v1289
        %v1291 = vrot.slane %v1281, %v1290
        %v1292 = vlaneseq
        %v1293 = vshrl.u32 %v1292, 7
        %v1294 = vsub.s32 1, %v1293
        %v1295 = vrot.slane %v1285, %v1294
        %v1296 = vsel %vm1213, %v1291, 0.0
        %v1297 = vsel %vm1214, %v1295, 0.0
        %v1298 = vsel %vm1215, %v1291, 0.0
        %v1299 = vsel %vm1216, %v1295, 0.0
        %v1300 = vsel %vm1217, %v1291, 0.0
        %v1301 = vsel %vm1218, %v1295, 0.0
        %v1302 = vsel %vm1219, %v1291, 0.0
        %v1303 = vsel %vm1220, %v1295, 0.0
        %v1304 = vsel %vm1221, %v1291, 0.0
        %v1305 = vsel %vm1222, %v1295, 0.0
        %v1306 = vsel %vm1223, %v1291, 0.0
        %v1307 = vsel %vm1224, %v1295, 0.0
        %v1308 = vsel %vm1225, %v1291, 0.0
        %v1309 = vsel %vm1226, %v1295, 0.0
        %v1310 = vsel %vm1227, %v1291, 0.0
        %v1311 = vsel %vm1228, %v1295, 0.0
        %v1312 = vsel %vm1229, %v1291, 0.0
        %v1313 = vsel %vm1230, %v1295, 0.0
        %v1314 = vsel %vm1231, %v1291, 0.0
        %v1315 = vsel %vm1232, %v1295, 0.0
        %v1316 = vsel %vm1233, %v1291, 0.0
        %v1317 = vsel %vm1234, %v1295, 0.0
        %v1318 = vsel %vm1235, %v1291, 0.0
        %v1319 = vsel %vm1236, %v1295, 0.0
        %v1320 = vsel %vm1237, %v1291, 0.0
        %v1321 = vsel %vm1238, %v1295, 0.0
        %v1322 = vsel %vm1239, %v1291, 0.0
        %v1323 = vsel %vm1240, %v1295, 0.0
        %v1324 = vsel %vm1241, %v1291, 0.0
        %v1325 = vsel %vm1242, %v1295, 0.0
        %v1326 = vsel %vm1243, %v1291, 0.0
        %v1327 = vsel %vm1244, %v1295, 0.0
        %v1328 = vsel %vm1245, %v1291, 0.0
        %v1329 = vsel %vm1246, %v1295, 0.0
        %v1330 = vsel %vm1247, %v1291, 0.0
        %v1331 = vsel %vm1248, %v1295, 0.0
        %v1332 = vsel %vm1249, %v1291, 0.0
        %v1333 = vsel %vm1250, %v1295, 0.0
        %v1334 = vsel %vm1251, %v1291, 0.0
        %v1335 = vsel %vm1252, %v1295, 0.0
        %v1336 = vsel %vm1253, %v1291, 0.0
        %v1337 = vsel %vm1254, %v1295, 0.0
        %v1338 = vsel %vm1255, %v1291, 0.0
        %v1339 = vsel %vm1256, %v1295, 0.0
        %v1340 = vsel %vm1257, %v1291, 0.0
        %v1341 = vsel %vm1258, %v1295, 0.0
        %v1342 = vsel %vm1259, %v1291, 0.0
        %v1343 = vsel %vm1260, %v1295, 0.0
        %v1344 = vsel %vm1261, %v1291, 0.0
        %v1345 = vsel %vm1262, %v1295, 0.0
        %v1346 = vsel %vm1263, %v1291, 0.0
        %v1347 = vsel %vm1264, %v1295, 0.0
        %v1348 = vsel %vm1265, %v1291, 0.0
        %v1349 = vsel %vm1266, %v1295, 0.0
        %v1350 = vsel %vm1267, %v1291, 0.0
        %v1351 = vsel %vm1268, %v1295, 0.0
        %v1352 = vsel %vm1269, %v1291, 0.0
        %v1353 = vsel %vm1270, %v1295, 0.0
        %v1354 = vsel %vm1271, %v1291, 0.0
        %v1355 = vsel %vm1272, %v1295, 0.0
        %v1356 = vsel %vm1273, %v1291, 0.0
        %v1357 = vsel %vm1274, %v1295, 0.0
        %v1358 = vsel %vm1275, %v1291, 0.0
        %v1359 = vsel %vm1276, %v1295, 0.0
        %v1361 = vrot.slane %v1057, 7
        %v1363 = vmul.f32 %v1058, %v1361
        %vm1364 = vcmp.ge.s32.totalorder %v1060, 0
        %vm1365 = vcmp.lt.s32.totalorder %v1060, 16
        %vm1366 = vmand %vm1364, %vm1365
        %vm1367 = vmand %vm1366, %vm1104
        %vm1368 = vmand %vm1367, %vm1109
        %v1369 = vrot.slane %v1060, 7
        %v1370 = vadd.s32 %v1111, %v1369
        %v1371 = vlaneseq
        %v1372 = vshrl.u32 %v1371, 7
        %v1373 = vsub.s32 1, %v1372
        %v1374 = vrot.slane %v1370, %v1373
        %v1375 = vlaneseq
        %v1376 = vshrl.u32 %v1375, 7
        %v1377 = vsub.s32 3, %v1376
        %v1378 = vrot.slane %v1370, %v1377
        %v1379 = vlaneseq
        %v1380 = vshrl.u32 %v1379, 7
        %v1381 = vsub.s32 1, %v1380
        %v1382 = vrot.slane %v1374, %v1381
        %v1383 = vlaneseq
        %v1384 = vshrl.u32 %v1383, 7
        %v1385 = vsub.s32 1, %v1384
        %v1386 = vrot.slane %v1378, %v1385
        %vm1387 = vcmp.eq.s32.totalorder %v1062, %v1382
        %vm1388 = vcmp.eq.s32.totalorder %v1062, %v1386
        %vm1389 = vcmp.eq.s32.totalorder %v1063, %v1382
        %vm1390 = vcmp.eq.s32.totalorder %v1063, %v1386
        %vm1391 = vcmp.eq.s32.totalorder %v1064, %v1382
        %vm1392 = vcmp.eq.s32.totalorder %v1064, %v1386
        %vm1393 = vcmp.eq.s32.totalorder %v1065, %v1382
        %vm1394 = vcmp.eq.s32.totalorder %v1065, %v1386
        %vm1395 = vcmp.eq.s32.totalorder %v1066, %v1382
        %vm1396 = vcmp.eq.s32.totalorder %v1066, %v1386
        %vm1397 = vcmp.eq.s32.totalorder %v1067, %v1382
        %vm1398 = vcmp.eq.s32.totalorder %v1067, %v1386
        %vm1399 = vcmp.eq.s32.totalorder %v1068, %v1382
        %vm1400 = vcmp.eq.s32.totalorder %v1068, %v1386
        %vm1401 = vcmp.eq.s32.totalorder %v1069, %v1382
        %vm1402 = vcmp.eq.s32.totalorder %v1069, %v1386
        %vm1403 = vcmp.eq.s32.totalorder %v1070, %v1382
        %vm1404 = vcmp.eq.s32.totalorder %v1070, %v1386
        %vm1405 = vcmp.eq.s32.totalorder %v1071, %v1382
        %vm1406 = vcmp.eq.s32.totalorder %v1071, %v1386
        %vm1407 = vcmp.eq.s32.totalorder %v1072, %v1382
        %vm1408 = vcmp.eq.s32.totalorder %v1072, %v1386
        %vm1409 = vcmp.eq.s32.totalorder %v1073, %v1382
        %vm1410 = vcmp.eq.s32.totalorder %v1073, %v1386
        %vm1411 = vcmp.eq.s32.totalorder %v1074, %v1382
        %vm1412 = vcmp.eq.s32.totalorder %v1074, %v1386
        %vm1413 = vcmp.eq.s32.totalorder %v1075, %v1382
        %vm1414 = vcmp.eq.s32.totalorder %v1075, %v1386
        %vm1415 = vcmp.eq.s32.totalorder %v1076, %v1382
        %vm1416 = vcmp.eq.s32.totalorder %v1076, %v1386
        %vm1417 = vcmp.eq.s32.totalorder %v1077, %v1382
        %vm1418 = vcmp.eq.s32.totalorder %v1077, %v1386
        %vm1419 = vcmp.eq.s32.totalorder %v1078, %v1382
        %vm1420 = vcmp.eq.s32.totalorder %v1078, %v1386
        %vm1421 = vcmp.eq.s32.totalorder %v1079, %v1382
        %vm1422 = vcmp.eq.s32.totalorder %v1079, %v1386
        %vm1423 = vcmp.eq.s32.totalorder %v1080, %v1382
        %vm1424 = vcmp.eq.s32.totalorder %v1080, %v1386
        %vm1425 = vcmp.eq.s32.totalorder %v1081, %v1382
        %vm1426 = vcmp.eq.s32.totalorder %v1081, %v1386
        %vm1427 = vcmp.eq.s32.totalorder %v1082, %v1382
        %vm1428 = vcmp.eq.s32.totalorder %v1082, %v1386
        %vm1429 = vcmp.eq.s32.totalorder %v1083, %v1382
        %vm1430 = vcmp.eq.s32.totalorder %v1083, %v1386
        %vm1431 = vcmp.eq.s32.totalorder %v1084, %v1382
        %vm1432 = vcmp.eq.s32.totalorder %v1084, %v1386
        %vm1433 = vcmp.eq.s32.totalorder %v1085, %v1382
        %vm1434 = vcmp.eq.s32.totalorder %v1085, %v1386
        %vm1435 = vcmp.eq.s32.totalorder %v1086, %v1382
        %vm1436 = vcmp.eq.s32.totalorder %v1086, %v1386
        %vm1437 = vcmp.eq.s32.totalorder %v1087, %v1382
        %vm1438 = vcmp.eq.s32.totalorder %v1087, %v1386
        %vm1439 = vcmp.eq.s32.totalorder %v1088, %v1382
        %vm1440 = vcmp.eq.s32.totalorder %v1088, %v1386
        %vm1441 = vcmp.eq.s32.totalorder %v1089, %v1382
        %vm1442 = vcmp.eq.s32.totalorder %v1089, %v1386
        %vm1443 = vcmp.eq.s32.totalorder %v1090, %v1382
        %vm1444 = vcmp.eq.s32.totalorder %v1090, %v1386
        %vm1445 = vcmp.eq.s32.totalorder %v1091, %v1382
        %vm1446 = vcmp.eq.s32.totalorder %v1091, %v1386
        %vm1447 = vcmp.eq.s32.totalorder %v1092, %v1382
        %vm1448 = vcmp.eq.s32.totalorder %v1092, %v1386
        %vm1449 = vcmp.eq.s32.totalorder %v1093, %v1382
        %vm1450 = vcmp.eq.s32.totalorder %v1093, %v1386
        %v1451 = vsel %vm1368, 1, 0
        %v1452 = vlaneseq
        %v1453 = vshrl.u32 %v1452, 7
        %v1454 = vsub.s32 0, %v1453
        %v1455 = vrot.slane %v1451, %v1454
        %v1456 = vlaneseq
        %v1457 = vshrl.u32 %v1456, 7
        %v1458 = vsub.s32 2, %v1457
        %v1459 = vrot.slane %v1451, %v1458
        %v1460 = vlaneseq
        %v1461 = vshrl.u32 %v1460, 7
        %v1462 = vsub.s32 0, %v1461
        %v1463 = vrot.slane %v1455, %v1462
        %v1464 = vlaneseq
        %v1465 = vshrl.u32 %v1464, 7
        %v1466 = vsub.s32 0, %v1465
        %v1467 = vrot.slane %v1459, %v1466
        %vm1468 = vcmp.eq.s32.totalorder %v1463, 1
        %vm1469 = vcmp.eq.s32.totalorder %v1467, 1
        %vm1470 = vmand %vm1387, %vm1468
        %vm1471 = vmand %vm1388, %vm1469
        %vm1472 = vmand %vm1389, %vm1468
        %vm1473 = vmand %vm1390, %vm1469
        %vm1474 = vmand %vm1391, %vm1468
        %vm1475 = vmand %vm1392, %vm1469
        %vm1476 = vmand %vm1393, %vm1468
        %vm1477 = vmand %vm1394, %vm1469
        %vm1478 = vmand %vm1395, %vm1468
        %vm1479 = vmand %vm1396, %vm1469
        %vm1480 = vmand %vm1397, %vm1468
        %vm1481 = vmand %vm1398, %vm1469
        %vm1482 = vmand %vm1399, %vm1468
        %vm1483 = vmand %vm1400, %vm1469
        %vm1484 = vmand %vm1401, %vm1468
        %vm1485 = vmand %vm1402, %vm1469
        %vm1486 = vmand %vm1403, %vm1468
        %vm1487 = vmand %vm1404, %vm1469
        %vm1488 = vmand %vm1405, %vm1468
        %vm1489 = vmand %vm1406, %vm1469
        %vm1490 = vmand %vm1407, %vm1468
        %vm1491 = vmand %vm1408, %vm1469
        %vm1492 = vmand %vm1409, %vm1468
        %vm1493 = vmand %vm1410, %vm1469
        %vm1494 = vmand %vm1411, %vm1468
        %vm1495 = vmand %vm1412, %vm1469
        %vm1496 = vmand %vm1413, %vm1468
        %vm1497 = vmand %vm1414, %vm1469
        %vm1498 = vmand %vm1415, %vm1468
        %vm1499 = vmand %vm1416, %vm1469
        %vm1500 = vmand %vm1417, %vm1468
        %vm1501 = vmand %vm1418, %vm1469
        %vm1502 = vmand %vm1419, %vm1468
        %vm1503 = vmand %vm1420, %vm1469
        %vm1504 = vmand %vm1421, %vm1468
        %vm1505 = vmand %vm1422, %vm1469
        %vm1506 = vmand %vm1423, %vm1468
        %vm1507 = vmand %vm1424, %vm1469
        %vm1508 = vmand %vm1425, %vm1468
        %vm1509 = vmand %vm1426, %vm1469
        %vm1510 = vmand %vm1427, %vm1468
        %vm1511 = vmand %vm1428, %vm1469
        %vm1512 = vmand %vm1429, %vm1468
        %vm1513 = vmand %vm1430, %vm1469
        %vm1514 = vmand %vm1431, %vm1468
        %vm1515 = vmand %vm1432, %vm1469
        %vm1516 = vmand %vm1433, %vm1468
        %vm1517 = vmand %vm1434, %vm1469
        %vm1518 = vmand %vm1435, %vm1468
        %vm1519 = vmand %vm1436, %vm1469
        %vm1520 = vmand %vm1437, %vm1468
        %vm1521 = vmand %vm1438, %vm1469
        %vm1522 = vmand %vm1439, %vm1468
        %vm1523 = vmand %vm1440, %vm1469
        %vm1524 = vmand %vm1441, %vm1468
        %vm1525 = vmand %vm1442, %vm1469
        %vm1526 = vmand %vm1443, %vm1468
        %vm1527 = vmand %vm1444, %vm1469
        %vm1528 = vmand %vm1445, %vm1468
        %vm1529 = vmand %vm1446, %vm1469
        %vm1530 = vmand %vm1447, %vm1468
        %vm1531 = vmand %vm1448, %vm1469
        %vm1532 = vmand %vm1449, %vm1468
        %vm1533 = vmand %vm1450, %vm1469
        %v1535 = vlaneseq
        %v1536 = vshrl.u32 %v1535, 7
        %v1537 = vsub.s32 1, %v1536
        %v1538 = vrot.slane %v1363, %v1537
        %v1539 = vlaneseq
        %v1540 = vshrl.u32 %v1539, 7
        %v1541 = vsub.s32 3, %v1540
        %v1542 = vrot.slane %v1363, %v1541
        %v1545 = vlaneseq
        %v1546 = vshrl.u32 %v1545, 7
        %v1547 = vsub.s32 1, %v1546
        %v1548 = vrot.slane %v1538, %v1547
        %v1549 = vlaneseq
        %v1550 = vshrl.u32 %v1549, 7
        %v1551 = vsub.s32 1, %v1550
        %v1552 = vrot.slane %v1542, %v1551
        %v1553 = vsel %vm1470, %v1548, 0.0
        %v1554 = vsel %vm1471, %v1552, 0.0
        %v1555 = vsel %vm1472, %v1548, 0.0
        %v1556 = vsel %vm1473, %v1552, 0.0
        %v1557 = vsel %vm1474, %v1548, 0.0
        %v1558 = vsel %vm1475, %v1552, 0.0
        %v1559 = vsel %vm1476, %v1548, 0.0
        %v1560 = vsel %vm1477, %v1552, 0.0
        %v1561 = vsel %vm1478, %v1548, 0.0
        %v1562 = vsel %vm1479, %v1552, 0.0
        %v1563 = vsel %vm1480, %v1548, 0.0
        %v1564 = vsel %vm1481, %v1552, 0.0
        %v1565 = vsel %vm1482, %v1548, 0.0
        %v1566 = vsel %vm1483, %v1552, 0.0
        %v1567 = vsel %vm1484, %v1548, 0.0
        %v1568 = vsel %vm1485, %v1552, 0.0
        %v1569 = vsel %vm1486, %v1548, 0.0
        %v1570 = vsel %vm1487, %v1552, 0.0
        %v1571 = vsel %vm1488, %v1548, 0.0
        %v1572 = vsel %vm1489, %v1552, 0.0
        %v1573 = vsel %vm1490, %v1548, 0.0
        %v1574 = vsel %vm1491, %v1552, 0.0
        %v1575 = vsel %vm1492, %v1548, 0.0
        %v1576 = vsel %vm1493, %v1552, 0.0
        %v1577 = vsel %vm1494, %v1548, 0.0
        %v1578 = vsel %vm1495, %v1552, 0.0
        %v1579 = vsel %vm1496, %v1548, 0.0
        %v1580 = vsel %vm1497, %v1552, 0.0
        %v1581 = vsel %vm1498, %v1548, 0.0
        %v1582 = vsel %vm1499, %v1552, 0.0
        %v1583 = vsel %vm1500, %v1548, 0.0
        %v1584 = vsel %vm1501, %v1552, 0.0
        %v1585 = vsel %vm1502, %v1548, 0.0
        %v1586 = vsel %vm1503, %v1552, 0.0
        %v1587 = vsel %vm1504, %v1548, 0.0
        %v1588 = vsel %vm1505, %v1552, 0.0
        %v1589 = vsel %vm1506, %v1548, 0.0
        %v1590 = vsel %vm1507, %v1552, 0.0
        %v1591 = vsel %vm1508, %v1548, 0.0
        %v1592 = vsel %vm1509, %v1552, 0.0
        %v1593 = vsel %vm1510, %v1548, 0.0
        %v1594 = vsel %vm1511, %v1552, 0.0
        %v1595 = vsel %vm1512, %v1548, 0.0
        %v1596 = vsel %vm1513, %v1552, 0.0
        %v1597 = vsel %vm1514, %v1548, 0.0
        %v1598 = vsel %vm1515, %v1552, 0.0
        %v1599 = vsel %vm1516, %v1548, 0.0
        %v1600 = vsel %vm1517, %v1552, 0.0
        %v1601 = vsel %vm1518, %v1548, 0.0
        %v1602 = vsel %vm1519, %v1552, 0.0
        %v1603 = vsel %vm1520, %v1548, 0.0
        %v1604 = vsel %vm1521, %v1552, 0.0
        %v1605 = vsel %vm1522, %v1548, 0.0
        %v1606 = vsel %vm1523, %v1552, 0.0
        %v1607 = vsel %vm1524, %v1548, 0.0
        %v1608 = vsel %vm1525, %v1552, 0.0
        %v1609 = vsel %vm1526, %v1548, 0.0
        %v1610 = vsel %vm1527, %v1552, 0.0
        %v1611 = vsel %vm1528, %v1548, 0.0
        %v1612 = vsel %vm1529, %v1552, 0.0
        %v1613 = vsel %vm1530, %v1548, 0.0
        %v1614 = vsel %vm1531, %v1552, 0.0
        %v1615 = vsel %vm1532, %v1548, 0.0
        %v1616 = vsel %vm1533, %v1552, 0.0
        %v1617 = vadd.f32 %v1296, %v1553
        %v1618 = vadd.f32 %v1297, %v1554
        %v1619 = vadd.f32 %v1298, %v1555
        %v1620 = vadd.f32 %v1299, %v1556
        %v1621 = vadd.f32 %v1300, %v1557
        %v1622 = vadd.f32 %v1301, %v1558
        %v1623 = vadd.f32 %v1302, %v1559
        %v1624 = vadd.f32 %v1303, %v1560
        %v1625 = vadd.f32 %v1304, %v1561
        %v1626 = vadd.f32 %v1305, %v1562
        %v1627 = vadd.f32 %v1306, %v1563
        %v1628 = vadd.f32 %v1307, %v1564
        %v1629 = vadd.f32 %v1308, %v1565
        %v1630 = vadd.f32 %v1309, %v1566
        %v1631 = vadd.f32 %v1310, %v1567
        %v1632 = vadd.f32 %v1311, %v1568
        %v1633 = vadd.f32 %v1312, %v1569
        %v1634 = vadd.f32 %v1313, %v1570
        %v1635 = vadd.f32 %v1314, %v1571
        %v1636 = vadd.f32 %v1315, %v1572
        %v1637 = vadd.f32 %v1316, %v1573
        %v1638 = vadd.f32 %v1317, %v1574
        %v1639 = vadd.f32 %v1318, %v1575
        %v1640 = vadd.f32 %v1319, %v1576
        %v1641 = vadd.f32 %v1320, %v1577
        %v1642 = vadd.f32 %v1321, %v1578
        %v1643 = vadd.f32 %v1322, %v1579
        %v1644 = vadd.f32 %v1323, %v1580
        %v1645 = vadd.f32 %v1324, %v1581
        %v1646 = vadd.f32 %v1325, %v1582
        %v1647 = vadd.f32 %v1326, %v1583
        %v1648 = vadd.f32 %v1327, %v1584
        %v1649 = vadd.f32 %v1328, %v1585
        %v1650 = vadd.f32 %v1329, %v1586
        %v1651 = vadd.f32 %v1330, %v1587
        %v1652 = vadd.f32 %v1331, %v1588
        %v1653 = vadd.f32 %v1332, %v1589
        %v1654 = vadd.f32 %v1333, %v1590
        %v1655 = vadd.f32 %v1334, %v1591
        %v1656 = vadd.f32 %v1335, %v1592
        %v1657 = vadd.f32 %v1336, %v1593
        %v1658 = vadd.f32 %v1337, %v1594
        %v1659 = vadd.f32 %v1338, %v1595
        %v1660 = vadd.f32 %v1339, %v1596
        %v1661 = vadd.f32 %v1340, %v1597
        %v1662 = vadd.f32 %v1341, %v1598
        %v1663 = vadd.f32 %v1342, %v1599
        %v1664 = vadd.f32 %v1343, %v1600
        %v1665 = vadd.f32 %v1344, %v1601
        %v1666 = vadd.f32 %v1345, %v1602
        %v1667 = vadd.f32 %v1346, %v1603
        %v1668 = vadd.f32 %v1347, %v1604
        %v1669 = vadd.f32 %v1348, %v1605
        %v1670 = vadd.f32 %v1349, %v1606
        %v1671 = vadd.f32 %v1350, %v1607
        %v1672 = vadd.f32 %v1351, %v1608
        %v1673 = vadd.f32 %v1352, %v1609
        %v1674 = vadd.f32 %v1353, %v1610
        %v1675 = vadd.f32 %v1354, %v1611
        %v1676 = vadd.f32 %v1355, %v1612
        %v1677 = vadd.f32 %v1356, %v1613
        %v1678 = vadd.f32 %v1357, %v1614
        %v1679 = vadd.f32 %v1358, %v1615
        %v1680 = vadd.f32 %v1359, %v1616
        %v1681 = vmul.f32 %v1057, %v1095
        %v1682 = vsel %vm1364, 1, 0
        %v1683 = vrot.slane %v1682, 7
        %v1684 = vrot.slane %v1683, 2
        %vm1685 = vcmp.ne.s32.totalorder %v1684, 0
        %vm1686 = vmand %vm1100, %vm1685
        %v1687 = vsel %vm1365, 1, 0
        %v1688 = vrot.slane %v1687, 7
        %v1689 = vrot.slane %v1688, 2
        %vm1690 = vcmp.ne.s32.totalorder %v1689, 0
        %vm1691 = vmand %vm1686, %vm1690
        %v1692 = vmul.u32 %v1060, 16
        %v1693 = vadd.s32 %v1692, %v1112
        %v1694 = vlaneseq
        %v1695 = vshrl.u32 %v1694, 7
        %v1696 = vsub.s32 1, %v1695
        %v1697 = vrot.slane %v1693, %v1696
        %v1698 = vlaneseq
        %v1699 = vshrl.u32 %v1698, 7
        %v1700 = vsub.s32 3, %v1699
        %v1701 = vrot.slane %v1693, %v1700
        %v1702 = vlaneseq
        %v1703 = vshrl.u32 %v1702, 7
        %v1704 = vsub.s32 1, %v1703
        %v1705 = vrot.slane %v1697, %v1704
        %v1706 = vlaneseq
        %v1707 = vshrl.u32 %v1706, 7
        %v1708 = vsub.s32 1, %v1707
        %v1709 = vrot.slane %v1701, %v1708
        %vm1710 = vcmp.eq.s32.totalorder %v1062, %v1705
        %vm1711 = vcmp.eq.s32.totalorder %v1062, %v1709
        %vm1712 = vcmp.eq.s32.totalorder %v1063, %v1705
        %vm1713 = vcmp.eq.s32.totalorder %v1063, %v1709
        %vm1714 = vcmp.eq.s32.totalorder %v1064, %v1705
        %vm1715 = vcmp.eq.s32.totalorder %v1064, %v1709
        %vm1716 = vcmp.eq.s32.totalorder %v1065, %v1705
        %vm1717 = vcmp.eq.s32.totalorder %v1065, %v1709
        %vm1718 = vcmp.eq.s32.totalorder %v1066, %v1705
        %vm1719 = vcmp.eq.s32.totalorder %v1066, %v1709
        %vm1720 = vcmp.eq.s32.totalorder %v1067, %v1705
        %vm1721 = vcmp.eq.s32.totalorder %v1067, %v1709
        %vm1722 = vcmp.eq.s32.totalorder %v1068, %v1705
        %vm1723 = vcmp.eq.s32.totalorder %v1068, %v1709
        %vm1724 = vcmp.eq.s32.totalorder %v1069, %v1705
        %vm1725 = vcmp.eq.s32.totalorder %v1069, %v1709
        %vm1726 = vcmp.eq.s32.totalorder %v1070, %v1705
        %vm1727 = vcmp.eq.s32.totalorder %v1070, %v1709
        %vm1728 = vcmp.eq.s32.totalorder %v1071, %v1705
        %vm1729 = vcmp.eq.s32.totalorder %v1071, %v1709
        %vm1730 = vcmp.eq.s32.totalorder %v1072, %v1705
        %vm1731 = vcmp.eq.s32.totalorder %v1072, %v1709
        %vm1732 = vcmp.eq.s32.totalorder %v1073, %v1705
        %vm1733 = vcmp.eq.s32.totalorder %v1073, %v1709
        %vm1734 = vcmp.eq.s32.totalorder %v1074, %v1705
        %vm1735 = vcmp.eq.s32.totalorder %v1074, %v1709
        %vm1736 = vcmp.eq.s32.totalorder %v1075, %v1705
        %vm1737 = vcmp.eq.s32.totalorder %v1075, %v1709
        %vm1738 = vcmp.eq.s32.totalorder %v1076, %v1705
        %vm1739 = vcmp.eq.s32.totalorder %v1076, %v1709
        %vm1740 = vcmp.eq.s32.totalorder %v1077, %v1705
        %vm1741 = vcmp.eq.s32.totalorder %v1077, %v1709
        %vm1742 = vcmp.eq.s32.totalorder %v1078, %v1705
        %vm1743 = vcmp.eq.s32.totalorder %v1078, %v1709
        %vm1744 = vcmp.eq.s32.totalorder %v1079, %v1705
        %vm1745 = vcmp.eq.s32.totalorder %v1079, %v1709
        %vm1746 = vcmp.eq.s32.totalorder %v1080, %v1705
        %vm1747 = vcmp.eq.s32.totalorder %v1080, %v1709
        %vm1748 = vcmp.eq.s32.totalorder %v1081, %v1705
        %vm1749 = vcmp.eq.s32.totalorder %v1081, %v1709
        %vm1750 = vcmp.eq.s32.totalorder %v1082, %v1705
        %vm1751 = vcmp.eq.s32.totalorder %v1082, %v1709
        %vm1752 = vcmp.eq.s32.totalorder %v1083, %v1705
        %vm1753 = vcmp.eq.s32.totalorder %v1083, %v1709
        %vm1754 = vcmp.eq.s32.totalorder %v1084, %v1705
        %vm1755 = vcmp.eq.s32.totalorder %v1084, %v1709
        %vm1756 = vcmp.eq.s32.totalorder %v1085, %v1705
        %vm1757 = vcmp.eq.s32.totalorder %v1085, %v1709
        %vm1758 = vcmp.eq.s32.totalorder %v1086, %v1705
        %vm1759 = vcmp.eq.s32.totalorder %v1086, %v1709
        %vm1760 = vcmp.eq.s32.totalorder %v1087, %v1705
        %vm1761 = vcmp.eq.s32.totalorder %v1087, %v1709
        %vm1762 = vcmp.eq.s32.totalorder %v1088, %v1705
        %vm1763 = vcmp.eq.s32.totalorder %v1088, %v1709
        %vm1764 = vcmp.eq.s32.totalorder %v1089, %v1705
        %vm1765 = vcmp.eq.s32.totalorder %v1089, %v1709
        %vm1766 = vcmp.eq.s32.totalorder %v1090, %v1705
        %vm1767 = vcmp.eq.s32.totalorder %v1090, %v1709
        %vm1768 = vcmp.eq.s32.totalorder %v1091, %v1705
        %vm1769 = vcmp.eq.s32.totalorder %v1091, %v1709
        %vm1770 = vcmp.eq.s32.totalorder %v1092, %v1705
        %vm1771 = vcmp.eq.s32.totalorder %v1092, %v1709
        %vm1772 = vcmp.eq.s32.totalorder %v1093, %v1705
        %vm1773 = vcmp.eq.s32.totalorder %v1093, %v1709
        %v1774 = vsel %vm1691, 1, 0
        %v1775 = vlaneseq
        %v1776 = vshrl.u32 %v1775, 7
        %v1777 = vsub.s32 0, %v1776
        %v1778 = vrot.slane %v1774, %v1777
        %v1779 = vlaneseq
        %v1780 = vshrl.u32 %v1779, 7
        %v1781 = vsub.s32 2, %v1780
        %v1782 = vrot.slane %v1774, %v1781
        %v1783 = vlaneseq
        %v1784 = vshrl.u32 %v1783, 7
        %v1785 = vsub.s32 0, %v1784
        %v1786 = vrot.slane %v1778, %v1785
        %v1787 = vlaneseq
        %v1788 = vshrl.u32 %v1787, 7
        %v1789 = vsub.s32 0, %v1788
        %v1790 = vrot.slane %v1782, %v1789
        %vm1791 = vcmp.eq.s32.totalorder %v1786, 1
        %vm1792 = vcmp.eq.s32.totalorder %v1790, 1
        %vm1793 = vmand %vm1710, %vm1791
        %vm1794 = vmand %vm1711, %vm1792
        %vm1795 = vmand %vm1712, %vm1791
        %vm1796 = vmand %vm1713, %vm1792
        %vm1797 = vmand %vm1714, %vm1791
        %vm1798 = vmand %vm1715, %vm1792
        %vm1799 = vmand %vm1716, %vm1791
        %vm1800 = vmand %vm1717, %vm1792
        %vm1801 = vmand %vm1718, %vm1791
        %vm1802 = vmand %vm1719, %vm1792
        %vm1803 = vmand %vm1720, %vm1791
        %vm1804 = vmand %vm1721, %vm1792
        %vm1805 = vmand %vm1722, %vm1791
        %vm1806 = vmand %vm1723, %vm1792
        %vm1807 = vmand %vm1724, %vm1791
        %vm1808 = vmand %vm1725, %vm1792
        %vm1809 = vmand %vm1726, %vm1791
        %vm1810 = vmand %vm1727, %vm1792
        %vm1811 = vmand %vm1728, %vm1791
        %vm1812 = vmand %vm1729, %vm1792
        %vm1813 = vmand %vm1730, %vm1791
        %vm1814 = vmand %vm1731, %vm1792
        %vm1815 = vmand %vm1732, %vm1791
        %vm1816 = vmand %vm1733, %vm1792
        %vm1817 = vmand %vm1734, %vm1791
        %vm1818 = vmand %vm1735, %vm1792
        %vm1819 = vmand %vm1736, %vm1791
        %vm1820 = vmand %vm1737, %vm1792
        %vm1821 = vmand %vm1738, %vm1791
        %vm1822 = vmand %vm1739, %vm1792
        %vm1823 = vmand %vm1740, %vm1791
        %vm1824 = vmand %vm1741, %vm1792
        %vm1825 = vmand %vm1742, %vm1791
        %vm1826 = vmand %vm1743, %vm1792
        %vm1827 = vmand %vm1744, %vm1791
        %vm1828 = vmand %vm1745, %vm1792
        %vm1829 = vmand %vm1746, %vm1791
        %vm1830 = vmand %vm1747, %vm1792
        %vm1831 = vmand %vm1748, %vm1791
        %vm1832 = vmand %vm1749, %vm1792
        %vm1833 = vmand %vm1750, %vm1791
        %vm1834 = vmand %vm1751, %vm1792
        %vm1835 = vmand %vm1752, %vm1791
        %vm1836 = vmand %vm1753, %vm1792
        %vm1837 = vmand %vm1754, %vm1791
        %vm1838 = vmand %vm1755, %vm1792
        %vm1839 = vmand %vm1756, %vm1791
        %vm1840 = vmand %vm1757, %vm1792
        %vm1841 = vmand %vm1758, %vm1791
        %vm1842 = vmand %vm1759, %vm1792
        %vm1843 = vmand %vm1760, %vm1791
        %vm1844 = vmand %vm1761, %vm1792
        %vm1845 = vmand %vm1762, %vm1791
        %vm1846 = vmand %vm1763, %vm1792
        %vm1847 = vmand %vm1764, %vm1791
        %vm1848 = vmand %vm1765, %vm1792
        %vm1849 = vmand %vm1766, %vm1791
        %vm1850 = vmand %vm1767, %vm1792
        %vm1851 = vmand %vm1768, %vm1791
        %vm1852 = vmand %vm1769, %vm1792
        %vm1853 = vmand %vm1770, %vm1791
        %vm1854 = vmand %vm1771, %vm1792
        %vm1855 = vmand %vm1772, %vm1791
        %vm1856 = vmand %vm1773, %vm1792
        %v1858 = vlaneseq
        %v1859 = vshrl.u32 %v1858, 7
        %v1860 = vsub.s32 1, %v1859
        %v1861 = vrot.slane %v1681, %v1860
        %v1862 = vlaneseq
        %v1863 = vshrl.u32 %v1862, 7
        %v1864 = vsub.s32 3, %v1863
        %v1865 = vrot.slane %v1681, %v1864
        %v1868 = vlaneseq
        %v1869 = vshrl.u32 %v1868, 7
        %v1870 = vsub.s32 1, %v1869
        %v1871 = vrot.slane %v1861, %v1870
        %v1872 = vlaneseq
        %v1873 = vshrl.u32 %v1872, 7
        %v1874 = vsub.s32 1, %v1873
        %v1875 = vrot.slane %v1865, %v1874
        %v1876 = vsel %vm1793, %v1871, 0.0
        %v1877 = vsel %vm1794, %v1875, 0.0
        %v1878 = vsel %vm1795, %v1871, 0.0
        %v1879 = vsel %vm1796, %v1875, 0.0
        %v1880 = vsel %vm1797, %v1871, 0.0
        %v1881 = vsel %vm1798, %v1875, 0.0
        %v1882 = vsel %vm1799, %v1871, 0.0
        %v1883 = vsel %vm1800, %v1875, 0.0
        %v1884 = vsel %vm1801, %v1871, 0.0
        %v1885 = vsel %vm1802, %v1875, 0.0
        %v1886 = vsel %vm1803, %v1871, 0.0
        %v1887 = vsel %vm1804, %v1875, 0.0
        %v1888 = vsel %vm1805, %v1871, 0.0
        %v1889 = vsel %vm1806, %v1875, 0.0
        %v1890 = vsel %vm1807, %v1871, 0.0
        %v1891 = vsel %vm1808, %v1875, 0.0
        %v1892 = vsel %vm1809, %v1871, 0.0
        %v1893 = vsel %vm1810, %v1875, 0.0
        %v1894 = vsel %vm1811, %v1871, 0.0
        %v1895 = vsel %vm1812, %v1875, 0.0
        %v1896 = vsel %vm1813, %v1871, 0.0
        %v1897 = vsel %vm1814, %v1875, 0.0
        %v1898 = vsel %vm1815, %v1871, 0.0
        %v1899 = vsel %vm1816, %v1875, 0.0
        %v1900 = vsel %vm1817, %v1871, 0.0
        %v1901 = vsel %vm1818, %v1875, 0.0
        %v1902 = vsel %vm1819, %v1871, 0.0
        %v1903 = vsel %vm1820, %v1875, 0.0
        %v1904 = vsel %vm1821, %v1871, 0.0
        %v1905 = vsel %vm1822, %v1875, 0.0
        %v1906 = vsel %vm1823, %v1871, 0.0
        %v1907 = vsel %vm1824, %v1875, 0.0
        %v1908 = vsel %vm1825, %v1871, 0.0
        %v1909 = vsel %vm1826, %v1875, 0.0
        %v1910 = vsel %vm1827, %v1871, 0.0
        %v1911 = vsel %vm1828, %v1875, 0.0
        %v1912 = vsel %vm1829, %v1871, 0.0
        %v1913 = vsel %vm1830, %v1875, 0.0
        %v1914 = vsel %vm1831, %v1871, 0.0
        %v1915 = vsel %vm1832, %v1875, 0.0
        %v1916 = vsel %vm1833, %v1871, 0.0
        %v1917 = vsel %vm1834, %v1875, 0.0
        %v1918 = vsel %vm1835, %v1871, 0.0
        %v1919 = vsel %vm1836, %v1875, 0.0
        %v1920 = vsel %vm1837, %v1871, 0.0
        %v1921 = vsel %vm1838, %v1875, 0.0
        %v1922 = vsel %vm1839, %v1871, 0.0
        %v1923 = vsel %vm1840, %v1875, 0.0
        %v1924 = vsel %vm1841, %v1871, 0.0
        %v1925 = vsel %vm1842, %v1875, 0.0
        %v1926 = vsel %vm1843, %v1871, 0.0
        %v1927 = vsel %vm1844, %v1875, 0.0
        %v1928 = vsel %vm1845, %v1871, 0.0
        %v1929 = vsel %vm1846, %v1875, 0.0
        %v1930 = vsel %vm1847, %v1871, 0.0
        %v1931 = vsel %vm1848, %v1875, 0.0
        %v1932 = vsel %vm1849, %v1871, 0.0
        %v1933 = vsel %vm1850, %v1875, 0.0
        %v1934 = vsel %vm1851, %v1871, 0.0
        %v1935 = vsel %vm1852, %v1875, 0.0
        %v1936 = vsel %vm1853, %v1871, 0.0
        %v1937 = vsel %vm1854, %v1875, 0.0
        %v1938 = vsel %vm1855, %v1871, 0.0
        %v1939 = vsel %vm1856, %v1875, 0.0
        %v1940 = vadd.f32 %v1617, %v1876
        %v1941 = vadd.f32 %v1618, %v1877
        %v1942 = vadd.f32 %v1619, %v1878
        %v1943 = vadd.f32 %v1620, %v1879
        %v1944 = vadd.f32 %v1621, %v1880
        %v1945 = vadd.f32 %v1622, %v1881
        %v1946 = vadd.f32 %v1623, %v1882
        %v1947 = vadd.f32 %v1624, %v1883
        %v1948 = vadd.f32 %v1625, %v1884
        %v1949 = vadd.f32 %v1626, %v1885
        %v1950 = vadd.f32 %v1627, %v1886
        %v1951 = vadd.f32 %v1628, %v1887
        %v1952 = vadd.f32 %v1629, %v1888
        %v1953 = vadd.f32 %v1630, %v1889
        %v1954 = vadd.f32 %v1631, %v1890
        %v1955 = vadd.f32 %v1632, %v1891
        %v1956 = vadd.f32 %v1633, %v1892
        %v1957 = vadd.f32 %v1634, %v1893
        %v1958 = vadd.f32 %v1635, %v1894
        %v1959 = vadd.f32 %v1636, %v1895
        %v1960 = vadd.f32 %v1637, %v1896
        %v1961 = vadd.f32 %v1638, %v1897
        %v1962 = vadd.f32 %v1639, %v1898
        %v1963 = vadd.f32 %v1640, %v1899
        %v1964 = vadd.f32 %v1641, %v1900
        %v1965 = vadd.f32 %v1642, %v1901
        %v1966 = vadd.f32 %v1643, %v1902
        %v1967 = vadd.f32 %v1644, %v1903
        %v1968 = vadd.f32 %v1645, %v1904
        %v1969 = vadd.f32 %v1646, %v1905
        %v1970 = vadd.f32 %v1647, %v1906
        %v1971 = vadd.f32 %v1648, %v1907
        %v1972 = vadd.f32 %v1649, %v1908
        %v1973 = vadd.f32 %v1650, %v1909
        %v1974 = vadd.f32 %v1651, %v1910
        %v1975 = vadd.f32 %v1652, %v1911
        %v1976 = vadd.f32 %v1653, %v1912
        %v1977 = vadd.f32 %v1654, %v1913
        %v1978 = vadd.f32 %v1655, %v1914
        %v1979 = vadd.f32 %v1656, %v1915
        %v1980 = vadd.f32 %v1657, %v1916
        %v1981 = vadd.f32 %v1658, %v1917
        %v1982 = vadd.f32 %v1659, %v1918
        %v1983 = vadd.f32 %v1660, %v1919
        %v1984 = vadd.f32 %v1661, %v1920
        %v1985 = vadd.f32 %v1662, %v1921
        %v1986 = vadd.f32 %v1663, %v1922
        %v1987 = vadd.f32 %v1664, %v1923
        %v1988 = vadd.f32 %v1665, %v1924
        %v1989 = vadd.f32 %v1666, %v1925
        %v1990 = vadd.f32 %v1667, %v1926
        %v1991 = vadd.f32 %v1668, %v1927
        %v1992 = vadd.f32 %v1669, %v1928
        %v1993 = vadd.f32 %v1670, %v1929
        %v1994 = vadd.f32 %v1671, %v1930
        %v1995 = vadd.f32 %v1672, %v1931
        %v1996 = vadd.f32 %v1673, %v1932
        %v1997 = vadd.f32 %v1674, %v1933
        %v1998 = vadd.f32 %v1675, %v1934
        %v1999 = vadd.f32 %v1676, %v1935
        %v2000 = vadd.f32 %v1677, %v1936
        %v2001 = vadd.f32 %v1678, %v1937
        %v2002 = vadd.f32 %v1679, %v1938
        %v2003 = vadd.f32 %v1680, %v1939
        %v2004 = vmul.f32 %v1057, %v1361
        %vm2005 = vmand %vm1366, %vm1685
        %vm2006 = vmand %vm2005, %vm1690
        %v2007 = vadd.s32 %v1692, %v1369
        %v2008 = vlaneseq
        %v2009 = vshrl.u32 %v2008, 7
        %v2010 = vsub.s32 1, %v2009
        %v2011 = vrot.slane %v2007, %v2010
        %v2012 = vlaneseq
        %v2013 = vshrl.u32 %v2012, 7
        %v2014 = vsub.s32 3, %v2013
        %v2015 = vrot.slane %v2007, %v2014
        %v2016 = vlaneseq
        %v2017 = vshrl.u32 %v2016, 7
        %v2018 = vsub.s32 1, %v2017
        %v2019 = vrot.slane %v2011, %v2018
        %v2020 = vlaneseq
        %v2021 = vshrl.u32 %v2020, 7
        %v2022 = vsub.s32 1, %v2021
        %v2023 = vrot.slane %v2015, %v2022
        %vm2024 = vcmp.eq.s32.totalorder %v1062, %v2019
        %vm2025 = vcmp.eq.s32.totalorder %v1062, %v2023
        %vm2026 = vcmp.eq.s32.totalorder %v1063, %v2019
        %vm2027 = vcmp.eq.s32.totalorder %v1063, %v2023
        %vm2028 = vcmp.eq.s32.totalorder %v1064, %v2019
        %vm2029 = vcmp.eq.s32.totalorder %v1064, %v2023
        %vm2030 = vcmp.eq.s32.totalorder %v1065, %v2019
        %vm2031 = vcmp.eq.s32.totalorder %v1065, %v2023
        %vm2032 = vcmp.eq.s32.totalorder %v1066, %v2019
        %vm2033 = vcmp.eq.s32.totalorder %v1066, %v2023
        %vm2034 = vcmp.eq.s32.totalorder %v1067, %v2019
        %vm2035 = vcmp.eq.s32.totalorder %v1067, %v2023
        %vm2036 = vcmp.eq.s32.totalorder %v1068, %v2019
        %vm2037 = vcmp.eq.s32.totalorder %v1068, %v2023
        %vm2038 = vcmp.eq.s32.totalorder %v1069, %v2019
        %vm2039 = vcmp.eq.s32.totalorder %v1069, %v2023
        %vm2040 = vcmp.eq.s32.totalorder %v1070, %v2019
        %vm2041 = vcmp.eq.s32.totalorder %v1070, %v2023
        %vm2042 = vcmp.eq.s32.totalorder %v1071, %v2019
        %vm2043 = vcmp.eq.s32.totalorder %v1071, %v2023
        %vm2044 = vcmp.eq.s32.totalorder %v1072, %v2019
        %vm2045 = vcmp.eq.s32.totalorder %v1072, %v2023
        %vm2046 = vcmp.eq.s32.totalorder %v1073, %v2019
        %vm2047 = vcmp.eq.s32.totalorder %v1073, %v2023
        %vm2048 = vcmp.eq.s32.totalorder %v1074, %v2019
        %vm2049 = vcmp.eq.s32.totalorder %v1074, %v2023
        %vm2050 = vcmp.eq.s32.totalorder %v1075, %v2019
        %vm2051 = vcmp.eq.s32.totalorder %v1075, %v2023
        %vm2052 = vcmp.eq.s32.totalorder %v1076, %v2019
        %vm2053 = vcmp.eq.s32.totalorder %v1076, %v2023
        %vm2054 = vcmp.eq.s32.totalorder %v1077, %v2019
        %vm2055 = vcmp.eq.s32.totalorder %v1077, %v2023
        %vm2056 = vcmp.eq.s32.totalorder %v1078, %v2019
        %vm2057 = vcmp.eq.s32.totalorder %v1078, %v2023
        %vm2058 = vcmp.eq.s32.totalorder %v1079, %v2019
        %vm2059 = vcmp.eq.s32.totalorder %v1079, %v2023
        %vm2060 = vcmp.eq.s32.totalorder %v1080, %v2019
        %vm2061 = vcmp.eq.s32.totalorder %v1080, %v2023
        %vm2062 = vcmp.eq.s32.totalorder %v1081, %v2019
        %vm2063 = vcmp.eq.s32.totalorder %v1081, %v2023
        %vm2064 = vcmp.eq.s32.totalorder %v1082, %v2019
        %vm2065 = vcmp.eq.s32.totalorder %v1082, %v2023
        %vm2066 = vcmp.eq.s32.totalorder %v1083, %v2019
        %vm2067 = vcmp.eq.s32.totalorder %v1083, %v2023
        %vm2068 = vcmp.eq.s32.totalorder %v1084, %v2019
        %vm2069 = vcmp.eq.s32.totalorder %v1084, %v2023
        %vm2070 = vcmp.eq.s32.totalorder %v1085, %v2019
        %vm2071 = vcmp.eq.s32.totalorder %v1085, %v2023
        %vm2072 = vcmp.eq.s32.totalorder %v1086, %v2019
        %vm2073 = vcmp.eq.s32.totalorder %v1086, %v2023
        %vm2074 = vcmp.eq.s32.totalorder %v1087, %v2019
        %vm2075 = vcmp.eq.s32.totalorder %v1087, %v2023
        %vm2076 = vcmp.eq.s32.totalorder %v1088, %v2019
        %vm2077 = vcmp.eq.s32.totalorder %v1088, %v2023
        %vm2078 = vcmp.eq.s32.totalorder %v1089, %v2019
        %vm2079 = vcmp.eq.s32.totalorder %v1089, %v2023
        %vm2080 = vcmp.eq.s32.totalorder %v1090, %v2019
        %vm2081 = vcmp.eq.s32.totalorder %v1090, %v2023
        %vm2082 = vcmp.eq.s32.totalorder %v1091, %v2019
        %vm2083 = vcmp.eq.s32.totalorder %v1091, %v2023
        %vm2084 = vcmp.eq.s32.totalorder %v1092, %v2019
        %vm2085 = vcmp.eq.s32.totalorder %v1092, %v2023
        %vm2086 = vcmp.eq.s32.totalorder %v1093, %v2019
        %vm2087 = vcmp.eq.s32.totalorder %v1093, %v2023
        %v2088 = vsel %vm2006, 1, 0
        %v2089 = vlaneseq
        %v2090 = vshrl.u32 %v2089, 7
        %v2091 = vsub.s32 0, %v2090
        %v2092 = vrot.slane %v2088, %v2091
        %v2093 = vlaneseq
        %v2094 = vshrl.u32 %v2093, 7
        %v2095 = vsub.s32 2, %v2094
        %v2096 = vrot.slane %v2088, %v2095
        %v2097 = vlaneseq
        %v2098 = vshrl.u32 %v2097, 7
        %v2099 = vsub.s32 0, %v2098
        %v2100 = vrot.slane %v2092, %v2099
        %v2101 = vlaneseq
        %v2102 = vshrl.u32 %v2101, 7
        %v2103 = vsub.s32 0, %v2102
        %v2104 = vrot.slane %v2096, %v2103
        %vm2105 = vcmp.eq.s32.totalorder %v2100, 1
        %vm2106 = vcmp.eq.s32.totalorder %v2104, 1
        %vm2107 = vmand %vm2024, %vm2105
        %vm2108 = vmand %vm2025, %vm2106
        %vm2109 = vmand %vm2026, %vm2105
        %vm2110 = vmand %vm2027, %vm2106
        %vm2111 = vmand %vm2028, %vm2105
        %vm2112 = vmand %vm2029, %vm2106
        %vm2113 = vmand %vm2030, %vm2105
        %vm2114 = vmand %vm2031, %vm2106
        %vm2115 = vmand %vm2032, %vm2105
        %vm2116 = vmand %vm2033, %vm2106
        %vm2117 = vmand %vm2034, %vm2105
        %vm2118 = vmand %vm2035, %vm2106
        %vm2119 = vmand %vm2036, %vm2105
        %vm2120 = vmand %vm2037, %vm2106
        %vm2121 = vmand %vm2038, %vm2105
        %vm2122 = vmand %vm2039, %vm2106
        %vm2123 = vmand %vm2040, %vm2105
        %vm2124 = vmand %vm2041, %vm2106
        %vm2125 = vmand %vm2042, %vm2105
        %vm2126 = vmand %vm2043, %vm2106
        %vm2127 = vmand %vm2044, %vm2105
        %vm2128 = vmand %vm2045, %vm2106
        %vm2129 = vmand %vm2046, %vm2105
        %vm2130 = vmand %vm2047, %vm2106
        %vm2131 = vmand %vm2048, %vm2105
        %vm2132 = vmand %vm2049, %vm2106
        %vm2133 = vmand %vm2050, %vm2105
        %vm2134 = vmand %vm2051, %vm2106
        %vm2135 = vmand %vm2052, %vm2105
        %vm2136 = vmand %vm2053, %vm2106
        %vm2137 = vmand %vm2054, %vm2105
        %vm2138 = vmand %vm2055, %vm2106
        %vm2139 = vmand %vm2056, %vm2105
        %vm2140 = vmand %vm2057, %vm2106
        %vm2141 = vmand %vm2058, %vm2105
        %vm2142 = vmand %vm2059, %vm2106
        %vm2143 = vmand %vm2060, %vm2105
        %vm2144 = vmand %vm2061, %vm2106
        %vm2145 = vmand %vm2062, %vm2105
        %vm2146 = vmand %vm2063, %vm2106
        %vm2147 = vmand %vm2064, %vm2105
        %vm2148 = vmand %vm2065, %vm2106
        %vm2149 = vmand %vm2066, %vm2105
        %vm2150 = vmand %vm2067, %vm2106
        %vm2151 = vmand %vm2068, %vm2105
        %vm2152 = vmand %vm2069, %vm2106
        %vm2153 = vmand %vm2070, %vm2105
        %vm2154 = vmand %vm2071, %vm2106
        %vm2155 = vmand %vm2072, %vm2105
        %vm2156 = vmand %vm2073, %vm2106
        %vm2157 = vmand %vm2074, %vm2105
        %vm2158 = vmand %vm2075, %vm2106
        %vm2159 = vmand %vm2076, %vm2105
        %vm2160 = vmand %vm2077, %vm2106
        %vm2161 = vmand %vm2078, %vm2105
        %vm2162 = vmand %vm2079, %vm2106
        %vm2163 = vmand %vm2080, %vm2105
        %vm2164 = vmand %vm2081, %vm2106
        %vm2165 = vmand %vm2082, %vm2105
        %vm2166 = vmand %vm2083, %vm2106
        %vm2167 = vmand %vm2084, %vm2105
        %vm2168 = vmand %vm2085, %vm2106
        %vm2169 = vmand %vm2086, %vm2105
        %vm2170 = vmand %vm2087, %vm2106
        %v2172 = vlaneseq
        %v2173 = vshrl.u32 %v2172, 7
        %v2174 = vsub.s32 1, %v2173
        %v2175 = vrot.slane %v2004, %v2174
        %v2176 = vlaneseq
        %v2177 = vshrl.u32 %v2176, 7
        %v2178 = vsub.s32 3, %v2177
        %v2179 = vrot.slane %v2004, %v2178
        %v2182 = vlaneseq
        %v2183 = vshrl.u32 %v2182, 7
        %v2184 = vsub.s32 1, %v2183
        %v2185 = vrot.slane %v2175, %v2184
        %v2186 = vlaneseq
        %v2187 = vshrl.u32 %v2186, 7
        %v2188 = vsub.s32 1, %v2187
        %v2189 = vrot.slane %v2179, %v2188
        %v2190 = vsel %vm2107, %v2185, 0.0
        %v2191 = vsel %vm2108, %v2189, 0.0
        %v2192 = vsel %vm2109, %v2185, 0.0
        %v2193 = vsel %vm2110, %v2189, 0.0
        %v2194 = vsel %vm2111, %v2185, 0.0
        %v2195 = vsel %vm2112, %v2189, 0.0
        %v2196 = vsel %vm2113, %v2185, 0.0
        %v2197 = vsel %vm2114, %v2189, 0.0
        %v2198 = vsel %vm2115, %v2185, 0.0
        %v2199 = vsel %vm2116, %v2189, 0.0
        %v2200 = vsel %vm2117, %v2185, 0.0
        %v2201 = vsel %vm2118, %v2189, 0.0
        %v2202 = vsel %vm2119, %v2185, 0.0
        %v2203 = vsel %vm2120, %v2189, 0.0
        %v2204 = vsel %vm2121, %v2185, 0.0
        %v2205 = vsel %vm2122, %v2189, 0.0
        %v2206 = vsel %vm2123, %v2185, 0.0
        %v2207 = vsel %vm2124, %v2189, 0.0
        %v2208 = vsel %vm2125, %v2185, 0.0
        %v2209 = vsel %vm2126, %v2189, 0.0
        %v2210 = vsel %vm2127, %v2185, 0.0
        %v2211 = vsel %vm2128, %v2189, 0.0
        %v2212 = vsel %vm2129, %v2185, 0.0
        %v2213 = vsel %vm2130, %v2189, 0.0
        %v2214 = vsel %vm2131, %v2185, 0.0
        %v2215 = vsel %vm2132, %v2189, 0.0
        %v2216 = vsel %vm2133, %v2185, 0.0
        %v2217 = vsel %vm2134, %v2189, 0.0
        %v2218 = vsel %vm2135, %v2185, 0.0
        %v2219 = vsel %vm2136, %v2189, 0.0
        %v2220 = vsel %vm2137, %v2185, 0.0
        %v2221 = vsel %vm2138, %v2189, 0.0
        %v2222 = vsel %vm2139, %v2185, 0.0
        %v2223 = vsel %vm2140, %v2189, 0.0
        %v2224 = vsel %vm2141, %v2185, 0.0
        %v2225 = vsel %vm2142, %v2189, 0.0
        %v2226 = vsel %vm2143, %v2185, 0.0
        %v2227 = vsel %vm2144, %v2189, 0.0
        %v2228 = vsel %vm2145, %v2185, 0.0
        %v2229 = vsel %vm2146, %v2189, 0.0
        %v2230 = vsel %vm2147, %v2185, 0.0
        %v2231 = vsel %vm2148, %v2189, 0.0
        %v2232 = vsel %vm2149, %v2185, 0.0
        %v2233 = vsel %vm2150, %v2189, 0.0
        %v2234 = vsel %vm2151, %v2185, 0.0
        %v2235 = vsel %vm2152, %v2189, 0.0
        %v2236 = vsel %vm2153, %v2185, 0.0
        %v2237 = vsel %vm2154, %v2189, 0.0
        %v2238 = vsel %vm2155, %v2185, 0.0
        %v2239 = vsel %vm2156, %v2189, 0.0
        %v2240 = vsel %vm2157, %v2185, 0.0
        %v2241 = vsel %vm2158, %v2189, 0.0
        %v2242 = vsel %vm2159, %v2185, 0.0
        %v2243 = vsel %vm2160, %v2189, 0.0
        %v2244 = vsel %vm2161, %v2185, 0.0
        %v2245 = vsel %vm2162, %v2189, 0.0
        %v2246 = vsel %vm2163, %v2185, 0.0
        %v2247 = vsel %vm2164, %v2189, 0.0
        %v2248 = vsel %vm2165, %v2185, 0.0
        %v2249 = vsel %vm2166, %v2189, 0.0
        %v2250 = vsel %vm2167, %v2185, 0.0
        %v2251 = vsel %vm2168, %v2189, 0.0
        %v2252 = vsel %vm2169, %v2185, 0.0
        %v2253 = vsel %vm2170, %v2189, 0.0
        %v2254 = vadd.f32 %v1940, %v2190
        %v2255 = vadd.f32 %v1941, %v2191
        %v2256 = vadd.f32 %v1942, %v2192
        %v2257 = vadd.f32 %v1943, %v2193
        %v2258 = vadd.f32 %v1944, %v2194
        %v2259 = vadd.f32 %v1945, %v2195
        %v2260 = vadd.f32 %v1946, %v2196
        %v2261 = vadd.f32 %v1947, %v2197
        %v2262 = vadd.f32 %v1948, %v2198
        %v2263 = vadd.f32 %v1949, %v2199
        %v2264 = vadd.f32 %v1950, %v2200
        %v2265 = vadd.f32 %v1951, %v2201
        %v2266 = vadd.f32 %v1952, %v2202
        %v2267 = vadd.f32 %v1953, %v2203
        %v2268 = vadd.f32 %v1954, %v2204
        %v2269 = vadd.f32 %v1955, %v2205
        %v2270 = vadd.f32 %v1956, %v2206
        %v2271 = vadd.f32 %v1957, %v2207
        %v2272 = vadd.f32 %v1958, %v2208
        %v2273 = vadd.f32 %v1959, %v2209
        %v2274 = vadd.f32 %v1960, %v2210
        %v2275 = vadd.f32 %v1961, %v2211
        %v2276 = vadd.f32 %v1962, %v2212
        %v2277 = vadd.f32 %v1963, %v2213
        %v2278 = vadd.f32 %v1964, %v2214
        %v2279 = vadd.f32 %v1965, %v2215
        %v2280 = vadd.f32 %v1966, %v2216
        %v2281 = vadd.f32 %v1967, %v2217
        %v2282 = vadd.f32 %v1968, %v2218
        %v2283 = vadd.f32 %v1969, %v2219
        %v2284 = vadd.f32 %v1970, %v2220
        %v2285 = vadd.f32 %v1971, %v2221
        %v2286 = vadd.f32 %v1972, %v2222
        %v2287 = vadd.f32 %v1973, %v2223
        %v2288 = vadd.f32 %v1974, %v2224
        %v2289 = vadd.f32 %v1975, %v2225
        %v2290 = vadd.f32 %v1976, %v2226
        %v2291 = vadd.f32 %v1977, %v2227
        %v2292 = vadd.f32 %v1978, %v2228
        %v2293 = vadd.f32 %v1979, %v2229
        %v2294 = vadd.f32 %v1980, %v2230
        %v2295 = vadd.f32 %v1981, %v2231
        %v2296 = vadd.f32 %v1982, %v2232
        %v2297 = vadd.f32 %v1983, %v2233
        %v2298 = vadd.f32 %v1984, %v2234
        %v2299 = vadd.f32 %v1985, %v2235
        %v2300 = vadd.f32 %v1986, %v2236
        %v2301 = vadd.f32 %v1987, %v2237
        %v2302 = vadd.f32 %v1988, %v2238
        %v2303 = vadd.f32 %v1989, %v2239
        %v2304 = vadd.f32 %v1990, %v2240
        %v2305 = vadd.f32 %v1991, %v2241
        %v2306 = vadd.f32 %v1992, %v2242
        %v2307 = vadd.f32 %v1993, %v2243
        %v2308 = vadd.f32 %v1994, %v2244
        %v2309 = vadd.f32 %v1995, %v2245
        %v2310 = vadd.f32 %v1996, %v2246
        %v2311 = vadd.f32 %v1997, %v2247
        %v2312 = vadd.f32 %v1998, %v2248
        %v2313 = vadd.f32 %v1999, %v2249
        %v2314 = vadd.f32 %v2000, %v2250
        %v2315 = vadd.f32 %v2001, %v2251
        %v2316 = vadd.f32 %v2002, %v2252
        %v2317 = vadd.f32 %v2003, %v2253
        %2318 = vmatprep.subr.mxu0 %v2255
        %2319 = vmatpush1.msra.mxu0 %v2254
        %2320 = vmatprep.subr.mxu0 %v2257
        %2321 = vmatpush1.msra.mxu0 %v2256
        %2322 = vmatprep.subr.mxu0 %v2259
        %2323 = vmatpush1.msra.mxu0 %v2258
        %2324 = vmatprep.subr.mxu0 %v2261
        %2325 = vmatpush1.msra.mxu0 %v2260
        %2326 = vmatprep.subr.mxu0 %v2263
        %2327 = vmatpush1.msra.mxu0 %v2262
        %2328 = vmatprep.subr.mxu0 %v2265
        %2329 = vmatpush1.msra.mxu0 %v2264
        %2330 = vmatprep.subr.mxu0 %v2267
        %2331 = vmatpush1.msra.mxu0 %v2266
        %2332 = vmatprep.subr.mxu0 %v2269
        %2333 = vmatpush1.msra.mxu0 %v2268
        %2334 = vmatprep.subr.mxu0 %v2271
        %2335 = vmatpush1.msra.mxu0 %v2270
        %2336 = vmatprep.subr.mxu0 %v2273
        %2337 = vmatpush1.msra.mxu0 %v2272
        %2338 = vmatprep.subr.mxu0 %v2275
        %2339 = vmatpush1.msra.mxu0 %v2274
        %2340 = vmatprep.subr.mxu0 %v2277
        %2341 = vmatpush1.msra.mxu0 %v2276
        %2342 = vmatprep.subr.mxu0 %v2279
        %2343 = vmatpush1.msra.mxu0 %v2278
        %2344 = vmatprep.subr.mxu0 %v2281
        %2345 = vmatpush1.msra.mxu0 %v2280
        %2346 = vmatprep.subr.mxu0 %v2283
        %2347 = vmatpush1.msra.mxu0 %v2282
        %2348 = vmatprep.subr.mxu0 %v2285
        %2349 = vmatpush1.msra.mxu0 %v2284
        %2350 = vmatprep.subr.mxu0 %v2287
        %2351 = vmatpush1.msra.mxu0 %v2286
        %2352 = vmatprep.subr.mxu0 %v2289
        %2353 = vmatpush1.msra.mxu0 %v2288
        %2354 = vmatprep.subr.mxu0 %v2291
        %2355 = vmatpush1.msra.mxu0 %v2290
        %2356 = vmatprep.subr.mxu0 %v2293
        %2357 = vmatpush1.msra.mxu0 %v2292
        %2358 = vmatprep.subr.mxu0 %v2295
        %2359 = vmatpush1.msra.mxu0 %v2294
        %2360 = vmatprep.subr.mxu0 %v2297
        %2361 = vmatpush1.msra.mxu0 %v2296
        %2362 = vmatprep.subr.mxu0 %v2299
        %2363 = vmatpush1.msra.mxu0 %v2298
        %2364 = vmatprep.subr.mxu0 %v2301
        %2365 = vmatpush1.msra.mxu0 %v2300
        %2366 = vmatprep.subr.mxu0 %v2303
        %2367 = vmatpush1.msra.mxu0 %v2302
        %2368 = vmatprep.subr.mxu0 %v2305
        %2369 = vmatpush1.msra.mxu0 %v2304
        %2370 = vmatprep.subr.mxu0 %v2307
        %2371 = vmatpush1.msra.mxu0 %v2306
        %2372 = vmatprep.subr.mxu0 %v2309
        %2373 = vmatpush1.msra.mxu0 %v2308
        %2374 = vmatprep.subr.mxu0 %v2311
        %2375 = vmatpush1.msra.mxu0 %v2310
        %2376 = vmatprep.subr.mxu0 %v2313
        %2377 = vmatpush1.msra.mxu0 %v2312
        %2378 = vmatprep.subr.mxu0 %v2315
        %2379 = vmatpush1.msra.mxu0 %v2314
        %2380 = vmatprep.subr.mxu0 %v2317
        %2381 = vmatpush1.msra.mxu0 %v2316
        %2382 = vmatprep.mubr.f32.mxu0 %v716
        %2383 = vmatmul.mubr.f32.gmra.mrb[0].mxu0 %v714
        %v2384 = vpop.f32.mrb[0].mxu0
        %v2385 = vadd.f32 0.0, %v2384
        %v2386 = vpop.f32.mrb[0].mxu0
        %v2387 = vadd.f32 0.0, %v2386
        %2388 = vdwg.mxu0
        %2389 = vst [vmem:[%s466] sm:$0xff] %v2385
        %2390 = vst [vmem:[%s466 + $0x8] sm:$0xff] %v2387
        %s2391 = sand.u32 %s260, 1
        %s2392 = scalar_lea.sflag [#allocation4], %s2391
        %s2393 = sand.u32 %s260, 1
        %s2394 = smul.addr %s2393, 16
        %s2395 = scalar_lea.vmem [#allocation13], %s2394
        // Predicated region
        $region85: #{tpu_custom_call.1} parent=59 // pred_check
          %p2396 = pneg %p270
        $region86: #{tpu_custom_call.1} parent=59 // pred_check_branch
          %2398 = sbr.rel (%p2396) target = $region88
        $region87: #{tpu_custom_call.1} parent=59 // pred_region
          %s2400 = ssub.s32 256, 256
          %2401 = vsyncadd %s2392, %s2400
          %s2402 = smul.addr %s32, 2
          %s2403 = smul.addr %s2402, 128
          %s2404 = scalar_lea.hbm %s10, %s2403
          %s2406 = sshll.u32 %s2395, 4
          %s2407 = int_to_ptr.vmem [resolvable:$true] %s2406
          %2409 = dma.vmem_to_hbm [thread:$0]  %s2407, 256, %s2404, %s2392
        $region88: #{tpu_custom_call.1} parent=59 // pred_fallthru
          _
      $region60: #{tpu_custom_call.1} parent=5 // pred_fallthru
        _
      %p2410 = scmp.le.s32.totalorder 2, %s27
      // Predicated region
      $region89: #{tpu_custom_call.1} parent=5 // pred_check
        %p2411 = pneg %p2410
      $region90: #{tpu_custom_call.1} parent=5 // pred_check_branch
        %2413 = sbr.rel (%p2411) target = $region92
      $region91: #{tpu_custom_call.1} parent=5 // pred_region
        %s2414 = ssub.s32 %s27, 2
        // Predicated region
        $region93: #{tpu_custom_call.1} parent=91 // pred_check
          %p2415 = pneg %p276
        $region94: #{tpu_custom_call.1} parent=91 // pred_check_branch
          %2417 = sbr.rel (%p2415) target = $region96
        $region95: #{tpu_custom_call.1} parent=91 // pred_region
          %s2418 = sand.u32 %s261, 1
          %s2419 = scalar_lea.sflag [#allocation4], %s2418
          %s2420 = sand.u32 %s261, 1
          %s2421 = smul.addr %s2420, 16
          %s2422 = scalar_lea.vmem [#allocation13], %s2421
          %2423 = dma.done %s2419, 256
        $region96: #{tpu_custom_call.1} parent=91 // pred_fallthru
          _
      $region92: #{tpu_custom_call.1} parent=5 // pred_fallthru
        _
    $region6: #{tpu_custom_call.1} parent=1 // loop_footer
      %s31 = sadd.s32 1, %s27
    $region7: #{tpu_custom_call.1} parent=1 // loop_footer_branch
      %26 = sbr.rel target = $region3
    $region8: #{tpu_custom_call.1} parent=1 // loop_exit
      _
    %2424 = vsyncpa [#allocation3], 1
    %s2425 = scalar_lea.sflag [#allocation3], 1
    %2426 = vsyncpa %s2425, 1
    %2427 = vsyncpa [#allocation6], 1
    %s2428 = scalar_lea.sflag [#allocation6], 1
    %2429 = vsyncpa %s2428, 1
    %2430 = vsyncpa [#allocation9], 1
    %2431 = vsyncpa [#allocation12], 1
    %2432 = vsyncpa [#allocation4], 1
    %s2433 = scalar_lea.sflag [#allocation4], 1
    %2434 = vsyncpa %s2433, 1

</llo_original>
